<compile_context>
chip_gen: v7x
topology: tpu7x:2x2x1
jax: 0.10.0
libtpu: 0.0.40
codegen_flags: <defaults>
</compile_context>

<pallas_src>
import functools
import math

import jax
import jax.numpy as jnp
from jax.experimental import pallas as pl
from jax.experimental.pallas import tpu as pltpu

LANE = 128


def _round_up(x, m):
    return (x + m - 1) // m * m


# ---------------------------------------------------------------------------
# Per-sample input normalization: (x - mean) / (unbiased_std + 1e-7)
# ---------------------------------------------------------------------------
def _input_norm_kernel(x_ref, o_ref, *, inv_nm1):
    x = x_ref[...]
    mean = jnp.mean(x, axis=1, keepdims=True)
    xc = x - mean
    var = jnp.sum(xc * xc, axis=1, keepdims=True) * inv_nm1
    std = jnp.sqrt(var) + 1e-7          # torch.std (unbiased, n-1) + eps
    o_ref[...] = xc / std


def input_norm(x_nchw):
    n = x_nchw.shape[0]
    d = x_nchw.shape[1] * x_nchw.shape[2] * x_nchw.shape[3]
    flat = x_nchw.reshape(n, d).astype(jnp.float32)
    out = pl.pallas_call(
        functools.partial(_input_norm_kernel, inv_nm1=1.0 / (d - 1)),
        out_shape=jax.ShapeDtypeStruct((n, d), jnp.float32),
    )(flat)
    return out.reshape(x_nchw.shape)


# ---------------------------------------------------------------------------
# Fused conv-as-matmul + folded BN + ReLU:
#   out[TM,128] = relu((A[TM,Kp] @ B[Kp,128]) * sb[0] + sb[1])
# A/B are bf16; accumulation and epilogue are f32.
# ---------------------------------------------------------------------------
def _conv_mm_kernel(a_ref, b_ref, sb_ref, o_ref, *, relu):
    acc = jnp.dot(a_ref[...], b_ref[...], preferred_element_type=jnp.float32)
    y = acc * sb_ref[0:1, :] + sb_ref[1:2, :]
    if relu:
        y = jnp.maximum(y, 0.0)
    o_ref[...] = y


def matmul_bn_relu(a, w_p, sb_p, *, n_out, relu=True):
    """a: (M, K) f32 im2col patches.  w_p: (Kp, 128) bf16 pre-padded weights.
    sb_p: (2, 128) f32 [scale; bias].  Returns (M, n_out) f32."""
    m, k = a.shape
    k_pad, n_pad = w_p.shape

    # Pad M only to the bf16 sublane-pack granularity (16), not 128.
    if m >= LANE:
        tm = LANE
        m_pad = _round_up(m, tm)
    else:
        m_pad = _round_up(m, 16)
        tm = m_pad

    a_bf = a.astype(jnp.bfloat16)
    if (m_pad, k_pad) != (m, k):        # skip the pad copy when already aligned
        a_bf = jnp.zeros((m_pad, k_pad), jnp.bfloat16).at[:m, :k].set(a_bf)

    out = pl.pallas_call(
        functools.partial(_conv_mm_kernel, relu=relu),
        out_shape=jax.ShapeDtypeStruct((m_pad, n_pad), jnp.float32),
        grid_spec=pltpu.PrefetchScalarGridSpec(
            num_scalar_prefetch=0,
            grid=(m_pad // tm,),
            in_specs=[
                pl.BlockSpec((tm, k_pad), lambda i: (i, 0)),
                pl.BlockSpec((k_pad, n_pad), lambda i: (0, 0)),
                pl.BlockSpec((2, n_pad), lambda i: (0, 0)),
            ],
            out_specs=pl.BlockSpec((tm, n_pad), lambda i: (i, 0)),
        ),
        compiler_params=pltpu.CompilerParams(
            dimension_semantics=("parallel",)),
    )(a_bf, w_p, sb_p)
    return out[:m, :n_out]


def conv_bn_relu(x, p):
    """x: NHWC f32.  3x3 conv, stride 2, no padding, folded BN, ReLU."""
    n, h, w, c = x.shape
    ho = (h - 3) // 2 + 1
    wo = (w - 3) // 2 + 1
    cols = []
    for ky in range(3):
        for kx in range(3):
            cols.append(x[:, ky:ky + 2 * (ho - 1) + 1:2,
                          kx:kx + 2 * (wo - 1) + 1:2, :])
    patches = jnp.concatenate(cols, axis=-1).reshape(n * ho * wo, 9 * c)
    out2d = matmul_bn_relu(patches, p["w"], p["sb"], n_out=p["cout"])
    return out2d.reshape(n, ho, wo, p["cout"])


# ---------------------------------------------------------------------------
# Deterministic parameter construction (synthetic; no checkpoint load).
# Weights / scale / bias are padded, transposed and cast ONCE here.
# ---------------------------------------------------------------------------
def build_patchnet_params(key):
    cfg = [(3, 16), (16, 32), (32, 64), (64, 128)]
    layers = []
    for cin, cout in cfg:
        key, kw, kb, kg, kbeta, km, kv = jax.random.split(key, 7)
        ksz = 3
        fan_in = cin * ksz * ksz
        w = jax.random.normal(kw, (cout, cin, ksz, ksz),
                              jnp.float32) / math.sqrt(fan_in)
        b = 0.05 * jax.random.normal(kb, (cout,), jnp.float32)
        gamma = 1.0 + 0.1 * jax.random.normal(kg, (cout,), jnp.float32)
        beta = 0.05 * jax.random.normal(kbeta, (cout,), jnp.float32)
        r_mean = 0.05 * jax.random.normal(km, (cout,), jnp.float32)
        r_var = 0.5 + jax.random.uniform(kv, (cout,), jnp.float32)

        scale = gamma / jnp.sqrt(r_var + 1e-5)        # eval-mode BN fold
        bias = scale * (b - r_mean) + beta            # conv bias folded in

        # (Cout,Cin,kh,kw) -> (kh,kw,Cin,Cout) -> (kh*kw*Cin, Cout): matches
        # the im2col channel ordering built in conv_bn_relu().
        w2d = jnp.transpose(w, (2, 3, 1, 0)).reshape(ksz * ksz * cin, cout)

        kdim = ksz * ksz * cin
        k_pad = _round_up(kdim, LANE)
        n_pad = _round_up(cout, LANE)
        w_p = (jnp.zeros((k_pad, n_pad), jnp.bfloat16)
               .at[:kdim, :cout].set(w2d.astype(jnp.bfloat16)))
        sb = (jnp.zeros((2, n_pad), jnp.float32)
              .at[0, :cout].set(scale)
              .at[1, :cout].set(bias))
        layers.append({"w": w_p, "sb": sb, "cout": cout})
    return {"layers": layers}


# ---------------------------------------------------------------------------
# Forward pass (matches PatchNetBN5l.forward)
# ---------------------------------------------------------------------------
def patchnet_forward(params, x_nchw):
    x = input_norm(x_nchw)                        # per-sample normalization
    x = jnp.transpose(x, (0, 2, 3, 1))            # NCHW -> NHWC
    for p in params["layers"]:
        x = conv_bn_relu(x, p)
    return jnp.transpose(x, (0, 3, 1, 2))         # back to NCHW


if __name__ == "__main__":
    key = jax.random.PRNGKey(0)
    pkey, xkey = jax.random.split(key)
    params = build_patchnet_params(pkey)

    # Smallest nice size that survives four stride-2 valid convs (needs H>=31).
    B, C, H, W = 2, 3, 32, 32
    x = jax.random.normal(xkey, (B, C, H, W), jnp.float32)

    fwd = jax.jit(lambda inp: patchnet_forward(params, inp))
    out = fwd(x)
    jax.block_until_ready(out)

    assert out.shape == (B, 128, 1, 1), out.shape
    assert out.dtype == jnp.float32
    assert bool(jnp.all(jnp.isfinite(out)))
    assert bool(jnp.all(out >= 0.0))              # final ReLU
    print("KERNEL_OK")
</pallas_src>

<mosaic_0001>
module attributes {stable_mosaic.version = 11 : i64} {
  func.func @_input_norm_kernel(%arg0: memref<2x3072xf32, #tpu.memory_space<vmem>>, %arg1: memref<2x3072xf32, #tpu.memory_space<vmem>>) attributes {dimension_semantics = [], scalar_prefetch = 0 : i64, scratch_operands = 0 : i64, tpu.core_type = #tpu.core_type<tc>} {
    %c0 = arith.constant 0 : index
    %c0_0 = arith.constant 0 : index
    %0 = vector.load %arg0[%c0, %c0_0] : memref<2x3072xf32, #tpu.memory_space<vmem>>, vector<2x3072xf32>
    %cst = arith.constant dense<0.000000e+00> : vector<2xf32>
    %1 = vector.multi_reduction <add>, %0, %cst [1] : vector<2x3072xf32> to vector<2xf32>
    %2 = vector.shape_cast %1 : vector<2xf32> to vector<2x1xf32>
    %cst_1 = arith.constant 3.072000e+03 : f32
    %3 = vector.broadcast %cst_1 : f32 to vector<2x1xf32>
    %4 = arith.divf %2, %3 : vector<2x1xf32>
    %5 = vector.broadcast %4 : vector<2x1xf32> to vector<2x3072xf32>
    %6 = arith.subf %0, %5 : vector<2x3072xf32>
    %7 = arith.mulf %6, %6 : vector<2x3072xf32>
    %cst_2 = arith.constant dense<0.000000e+00> : vector<2xf32>
    %8 = vector.multi_reduction <add>, %7, %cst_2 [1] : vector<2x3072xf32> to vector<2xf32>
    %9 = vector.shape_cast %8 : vector<2xf32> to vector<2x1xf32>
    %cst_3 = arith.constant 3.25626839E-4 : f32
    %10 = vector.broadcast %cst_3 : f32 to vector<2x1xf32>
    %11 = arith.mulf %9, %10 : vector<2x1xf32>
    %12 = math.sqrt %11 : vector<2x1xf32>
    %cst_4 = arith.constant 1.000000e-07 : f32
    %13 = vector.broadcast %cst_4 : f32 to vector<2x1xf32>
    %14 = arith.addf %12, %13 : vector<2x1xf32>
    %15 = vector.broadcast %14 : vector<2x1xf32> to vector<2x3072xf32>
    %16 = arith.divf %6, %15 : vector<2x3072xf32>
    %c0_5 = arith.constant 0 : index
    %c0_6 = arith.constant 0 : index
    %17 = vector.load %arg1[%c0_5, %c0_6] : memref<2x3072xf32, #tpu.memory_space<vmem>>, vector<2x3072xf32>
    tpu.vector_store %arg1[%c0_5, %c0_6], %16 {strides = array<i32>} : memref<2x3072xf32, #tpu.memory_space<vmem>>, vector<2x3072xf32>,
    return
  }
}

module attributes {stable_mosaic.version = 11 : i64} {
  func.func @_conv_mm_kernel(%arg0: i32, %arg1: memref<128x128xbf16, #tpu.memory_space<vmem>>, %arg2: memref<128x128xbf16, #tpu.memory_space<vmem>>, %arg3: memref<2x128xf32, #tpu.memory_space<vmem>>, %arg4: memref<128x128xf32, #tpu.memory_space<vmem>>) attributes {dimension_semantics = [#tpu.dimension_semantics<parallel>], iteration_bounds = array<i64: 4>, scalar_prefetch = 0 : i64, scratch_operands = 0 : i64, tpu.core_type = #tpu.core_type<tc>, window_params = [{transform_indices = @transform_0, window_bounds = array<i64: 128, 128>}, {pipeline_mode = #tpu.pipeline_mode<synchronous>, transform_indices = @transform_1, window_bounds = array<i64: 128, 128>}, {pipeline_mode = #tpu.pipeline_mode<synchronous>, transform_indices = @transform_2, window_bounds = array<i64: 2, 128>}, {transform_indices = @transform_3, window_bounds = array<i64: 128, 128>}]} {
    %c0 = arith.constant 0 : index
    %c0_0 = arith.constant 0 : index
    %0 = vector.load %arg1[%c0, %c0_0] : memref<128x128xbf16, #tpu.memory_space<vmem>>, vector<128x128xbf16>
    %c0_1 = arith.constant 0 : index
    %c0_2 = arith.constant 0 : index
    %1 = vector.load %arg2[%c0_1, %c0_2] : memref<128x128xbf16, #tpu.memory_space<vmem>>, vector<128x128xbf16>
    %cst = arith.constant dense<0.000000e+00> : vector<128x128xf32>
    %2 = tpu.matmul %0, %1, %cst {dimension_numbers = #tpu.dot_dimension_numbers<[1], [0], [0], [1], [0, 0, 1, 1], [], []>} : vector<128x128xbf16>, vector<128x128xbf16>, vector<128x128xf32> -> vector<128x128xf32>
    %c0_3 = arith.constant 0 : index
    %c0_4 = arith.constant 0 : index
    %3 = vector.load %arg3[%c0_3, %c0_4] : memref<2x128xf32, #tpu.memory_space<vmem>>, vector<1x128xf32>
    %4 = vector.broadcast %3 : vector<1x128xf32> to vector<128x128xf32>
    %5 = arith.mulf %2, %4 : vector<128x128xf32>
    %c1 = arith.constant 1 : index
    %c0_5 = arith.constant 0 : index
    %6 = vector.load %arg3[%c1, %c0_5] : memref<2x128xf32, #tpu.memory_space<vmem>>, vector<1x128xf32>
    %7 = vector.broadcast %6 : vector<1x128xf32> to vector<128x128xf32>
    %8 = arith.addf %5, %7 : vector<128x128xf32>
    %cst_6 = arith.constant 0.000000e+00 : f32
    %9 = vector.broadcast %cst_6 : f32 to vector<128x128xf32>
    %10 = arith.maximumf %8, %9 : vector<128x128xf32>
    %c0_7 = arith.constant 0 : index
    %c0_8 = arith.constant 0 : index
    %11 = vector.load %arg4[%c0_7, %c0_8] : memref<128x128xf32, #tpu.memory_space<vmem>>, vector<128x128xf32>
    tpu.vector_store %arg4[%c0_7, %c0_8], %10 {strides = array<i32>} : memref<128x128xf32, #tpu.memory_space<vmem>>, vector<128x128xf32>,
    return
  }
  func.func @transform_0(%arg0: i32) -> (i32, i32) {
    %c0_i32 = arith.constant 0 : i32
    %c0_i32_0 = arith.constant 0 : i32
    return %arg0, %c0_i32 : i32, i32
  }
  func.func @transform_1(%arg0: i32) -> (i32, i32) {
    %c0_i32 = arith.constant 0 : i32
    %c0_i32_0 = arith.constant 0 : i32
    %c0_i32_1 = arith.constant 0 : i32
    return %c0_i32, %c0_i32_0 : i32, i32
  }
  func.func @transform_2(%arg0: i32) -> (i32, i32) {
    %c0_i32 = arith.constant 0 : i32
    %c0_i32_0 = arith.constant 0 : i32
    %c0_i32_1 = arith.constant 0 : i32
    return %c0_i32, %c0_i32_0 : i32, i32
  }
  func.func @transform_3(%arg0: i32) -> (i32, i32) {
    %c0_i32 = arith.constant 0 : i32
    %c0_i32_0 = arith.constant 0 : i32
    return %arg0, %c0_i32 : i32, i32
  }
}

module attributes {stable_mosaic.version = 11 : i64} {
  func.func @_conv_mm_kernel(%arg0: i32, %arg1: memref<112x256xbf16, #tpu.memory_space<vmem>>, %arg2: memref<256x128xbf16, #tpu.memory_space<vmem>>, %arg3: memref<2x128xf32, #tpu.memory_space<vmem>>, %arg4: memref<112x128xf32, #tpu.memory_space<vmem>>) attributes {dimension_semantics = [#tpu.dimension_semantics<parallel>], iteration_bounds = array<i64: 1>, scalar_prefetch = 0 : i64, scratch_operands = 0 : i64, tpu.core_type = #tpu.core_type<tc>, window_params = [{transform_indices = @transform_0, window_bounds = array<i64: 112, 256>}, {pipeline_mode = #tpu.pipeline_mode<synchronous>, transform_indices = @transform_1, window_bounds = array<i64: 256, 128>}, {pipeline_mode = #tpu.pipeline_mode<synchronous>, transform_indices = @transform_2, window_bounds = array<i64: 2, 128>}, {transform_indices = @transform_3, window_bounds = array<i64: 112, 128>}]} {
    %c0 = arith.constant 0 : index
    %c0_0 = arith.constant 0 : index
    %0 = vector.load %arg1[%c0, %c0_0] : memref<112x256xbf16, #tpu.memory_space<vmem>>, vector<112x256xbf16>
    %c0_1 = arith.constant 0 : index
    %c0_2 = arith.constant 0 : index
    %1 = vector.load %arg2[%c0_1, %c0_2] : memref<256x128xbf16, #tpu.memory_space<vmem>>, vector<256x128xbf16>
    %cst = arith.constant dense<0.000000e+00> : vector<112x128xf32>
    %2 = tpu.matmul %0, %1, %cst {dimension_numbers = #tpu.dot_dimension_numbers<[1], [0], [0], [1], [0, 0, 1, 1], [], []>} : vector<112x256xbf16>, vector<256x128xbf16>, vector<112x128xf32> -> vector<112x128xf32>
    %c0_3 = arith.constant 0 : index
    %c0_4 = arith.constant 0 : index
    %3 = vector.load %arg3[%c0_3, %c0_4] : memref<2x128xf32, #tpu.memory_space<vmem>>, vector<1x128xf32>
    %4 = vector.broadcast %3 : vector<1x128xf32> to vector<112x128xf32>
    %5 = arith.mulf %2, %4 : vector<112x128xf32>
    %c1 = arith.constant 1 : index
    %c0_5 = arith.constant 0 : index
    %6 = vector.load %arg3[%c1, %c0_5] : memref<2x128xf32, #tpu.memory_space<vmem>>, vector<1x128xf32>
    %7 = vector.broadcast %6 : vector<1x128xf32> to vector<112x128xf32>
    %8 = arith.addf %5, %7 : vector<112x128xf32>
    %cst_6 = arith.constant 0.000000e+00 : f32
    %9 = vector.broadcast %cst_6 : f32 to vector<112x128xf32>
    %10 = arith.maximumf %8, %9 : vector<112x128xf32>
    %c0_7 = arith.constant 0 : index
    %c0_8 = arith.constant 0 : index
    %11 = vector.load %arg4[%c0_7, %c0_8] : memref<112x128xf32, #tpu.memory_space<vmem>>, vector<112x128xf32>
    tpu.vector_store %arg4[%c0_7, %c0_8], %10 {strides = array<i32>} : memref<112x128xf32, #tpu.memory_space<vmem>>, vector<112x128xf32>,
    return
  }
  func.func @transform_0(%arg0: i32) -> (i32, i32) {
    %c0_i32 = arith.constant 0 : i32
    %c0_i32_0 = arith.constant 0 : i32
    return %arg0, %c0_i32 : i32, i32
  }
  func.func @transform_1(%arg0: i32) -> (i32, i32) {
    %c0_i32 = arith.constant 0 : i32
    %c0_i32_0 = arith.constant 0 : i32
    %c0_i32_1 = arith.constant 0 : i32
    return %c0_i32, %c0_i32_0 : i32, i32
  }
  func.func @transform_2(%arg0: i32) -> (i32, i32) {
    %c0_i32 = arith.constant 0 : i32
    %c0_i32_0 = arith.constant 0 : i32
    %c0_i32_1 = arith.constant 0 : i32
    return %c0_i32, %c0_i32_0 : i32, i32
  }
  func.func @transform_3(%arg0: i32) -> (i32, i32) {
    %c0_i32 = arith.constant 0 : i32
    %c0_i32_0 = arith.constant 0 : i32
    return %arg0, %c0_i32 : i32, i32
  }
}

module attributes {stable_mosaic.version = 11 : i64} {
  func.func @_conv_mm_kernel(%arg0: i32, %arg1: memref<32x384xbf16, #tpu.memory_space<vmem>>, %arg2: memref<384x128xbf16, #tpu.memory_space<vmem>>, %arg3: memref<2x128xf32, #tpu.memory_space<vmem>>, %arg4: memref<32x128xf32, #tpu.memory_space<vmem>>) attributes {dimension_semantics = [#tpu.dimension_semantics<parallel>], iteration_bounds = array<i64: 1>, scalar_prefetch = 0 : i64, scratch_operands = 0 : i64, tpu.core_type = #tpu.core_type<tc>, window_params = [{transform_indices = @transform_0, window_bounds = array<i64: 32, 384>}, {pipeline_mode = #tpu.pipeline_mode<synchronous>, transform_indices = @transform_1, window_bounds = array<i64: 384, 128>}, {pipeline_mode = #tpu.pipeline_mode<synchronous>, transform_indices = @transform_2, window_bounds = array<i64: 2, 128>}, {transform_indices = @transform_3, window_bounds = array<i64: 32, 128>}]} {
    %c0 = arith.constant 0 : index
    %c0_0 = arith.constant 0 : index
    %0 = vector.load %arg1[%c0, %c0_0] : memref<32x384xbf16, #tpu.memory_space<vmem>>, vector<32x384xbf16>
    %c0_1 = arith.constant 0 : index
    %c0_2 = arith.constant 0 : index
    %1 = vector.load %arg2[%c0_1, %c0_2] : memref<384x128xbf16, #tpu.memory_space<vmem>>, vector<384x128xbf16>
    %cst = arith.constant dense<0.000000e+00> : vector<32x128xf32>
    %2 = tpu.matmul %0, %1, %cst {dimension_numbers = #tpu.dot_dimension_numbers<[1], [0], [0], [1], [0, 0, 1, 1], [], []>} : vector<32x384xbf16>, vector<384x128xbf16>, vector<32x128xf32> -> vector<32x128xf32>
    %c0_3 = arith.constant 0 : index
    %c0_4 = arith.constant 0 : index
    %3 = vector.load %arg3[%c0_3, %c0_4] : memref<2x128xf32, #tpu.memory_space<vmem>>, vector<1x128xf32>
    %4 = vector.broadcast %3 : vector<1x128xf32> to vector<32x128xf32>
    %5 = arith.mulf %2, %4 : vector<32x128xf32>
    %c1 = arith.constant 1 : index
    %c0_5 = arith.constant 0 : index
    %6 = vector.load %arg3[%c1, %c0_5] : memref<2x128xf32, #tpu.memory_space<vmem>>, vector<1x128xf32>
    %7 = vector.broadcast %6 : vector<1x128xf32> to vector<32x128xf32>
    %8 = arith.addf %5, %7 : vector<32x128xf32>
    %cst_6 = arith.constant 0.000000e+00 : f32
    %9 = vector.broadcast %cst_6 : f32 to vector<32x128xf32>
    %10 = arith.maximumf %8, %9 : vector<32x128xf32>
    %c0_7 = arith.constant 0 : index
    %c0_8 = arith.constant 0 : index
    %11 = vector.load %arg4[%c0_7, %c0_8] : memref<32x128xf32, #tpu.memory_space<vmem>>, vector<32x128xf32>
    tpu.vector_store %arg4[%c0_7, %c0_8], %10 {strides = array<i32>} : memref<32x128xf32, #tpu.memory_space<vmem>>, vector<32x128xf32>,
    return
  }
  func.func @transform_0(%arg0: i32) -> (i32, i32) {
    %c0_i32 = arith.constant 0 : i32
    %c0_i32_0 = arith.constant 0 : i32
    return %arg0, %c0_i32 : i32, i32
  }
  func.func @transform_1(%arg0: i32) -> (i32, i32) {
    %c0_i32 = arith.constant 0 : i32
    %c0_i32_0 = arith.constant 0 : i32
    %c0_i32_1 = arith.constant 0 : i32
    return %c0_i32, %c0_i32_0 : i32, i32
  }
  func.func @transform_2(%arg0: i32) -> (i32, i32) {
    %c0_i32 = arith.constant 0 : i32
    %c0_i32_0 = arith.constant 0 : i32
    %c0_i32_1 = arith.constant 0 : i32
    return %c0_i32, %c0_i32_0 : i32, i32
  }
  func.func @transform_3(%arg0: i32) -> (i32, i32) {
    %c0_i32 = arith.constant 0 : i32
    %c0_i32_0 = arith.constant 0 : i32
    return %arg0, %c0_i32 : i32, i32
  }
}

module attributes {stable_mosaic.version = 11 : i64} {
  func.func @_conv_mm_kernel(%arg0: i32, %arg1: memref<16x640xbf16, #tpu.memory_space<vmem>>, %arg2: memref<640x128xbf16, #tpu.memory_space<vmem>>, %arg3: memref<2x128xf32, #tpu.memory_space<vmem>>, %arg4: memref<16x128xf32, #tpu.memory_space<vmem>>) attributes {dimension_semantics = [#tpu.dimension_semantics<parallel>], iteration_bounds = array<i64: 1>, scalar_prefetch = 0 : i64, scratch_operands = 0 : i64, tpu.core_type = #tpu.core_type<tc>, window_params = [{transform_indices = @transform_0, window_bounds = array<i64: 16, 640>}, {pipeline_mode = #tpu.pipeline_mode<synchronous>, transform_indices = @transform_1, window_bounds = array<i64: 640, 128>}, {pipeline_mode = #tpu.pipeline_mode<synchronous>, transform_indices = @transform_2, window_bounds = array<i64: 2, 128>}, {transform_indices = @transform_3, window_bounds = array<i64: 16, 128>}]} {
    %c0 = arith.constant 0 : index
    %c0_0 = arith.constant 0 : index
    %0 = vector.load %arg1[%c0, %c0_0] : memref<16x640xbf16, #tpu.memory_space<vmem>>, vector<16x640xbf16>
    %c0_1 = arith.constant 0 : index
    %c0_2 = arith.constant 0 : index
    %1 = vector.load %arg2[%c0_1, %c0_2] : memref<640x128xbf16, #tpu.memory_space<vmem>>, vector<640x128xbf16>
    %cst = arith.constant dense<0.000000e+00> : vector<16x128xf32>
    %2 = tpu.matmul %0, %1, %cst {dimension_numbers = #tpu.dot_dimension_numbers<[1], [0], [0], [1], [0, 0, 1, 1], [], []>} : vector<16x640xbf16>, vector<640x128xbf16>, vector<16x128xf32> -> vector<16x128xf32>
    %c0_3 = arith.constant 0 : index
    %c0_4 = arith.constant 0 : index
    %3 = vector.load %arg3[%c0_3, %c0_4] : memref<2x128xf32, #tpu.memory_space<vmem>>, vector<1x128xf32>
    %4 = vector.broadcast %3 : vector<1x128xf32> to vector<16x128xf32>
    %5 = arith.mulf %2, %4 : vector<16x128xf32>
    %c1 = arith.constant 1 : index
    %c0_5 = arith.constant 0 : index
    %6 = vector.load %arg3[%c1, %c0_5] : memref<2x128xf32, #tpu.memory_space<vmem>>, vector<1x128xf32>
    %7 = vector.broadcast %6 : vector<1x128xf32> to vector<16x128xf32>
    %8 = arith.addf %5, %7 : vector<16x128xf32>
    %cst_6 = arith.constant 0.000000e+00 : f32
    %9 = vector.broadcast %cst_6 : f32 to vector<16x128xf32>
    %10 = arith.maximumf %8, %9 : vector<16x128xf32>
    %c0_7 = arith.constant 0 : index
    %c0_8 = arith.constant 0 : index
    %11 = vector.load %arg4[%c0_7, %c0_8] : memref<16x128xf32, #tpu.memory_space<vmem>>, vector<16x128xf32>
    tpu.vector_store %arg4[%c0_7, %c0_8], %10 {strides = array<i32>} : memref<16x128xf32, #tpu.memory_space<vmem>>, vector<16x128xf32>,
    return
  }
  func.func @transform_0(%arg0: i32) -> (i32, i32) {
    %c0_i32 = arith.constant 0 : i32
    %c0_i32_0 = arith.constant 0 : i32
    return %arg0, %c0_i32 : i32, i32
  }
  func.func @transform_1(%arg0: i32) -> (i32, i32) {
    %c0_i32 = arith.constant 0 : i32
    %c0_i32_0 = arith.constant 0 : i32
    %c0_i32_1 = arith.constant 0 : i32
    return %c0_i32, %c0_i32_0 : i32, i32
  }
  func.func @transform_2(%arg0: i32) -> (i32, i32) {
    %c0_i32 = arith.constant 0 : i32
    %c0_i32_0 = arith.constant 0 : i32
    %c0_i32_1 = arith.constant 0 : i32
    return %c0_i32, %c0_i32_0 : i32, i32
  }
  func.func @transform_3(%arg0: i32) -> (i32, i32) {
    %c0_i32 = arith.constant 0 : i32
    %c0_i32_0 = arith.constant 0 : i32
    return %arg0, %c0_i32 : i32, i32
  }
}

</mosaic_0001>

<llo_original>
// kernel: _lambda_.5
$region0: #{_lambda_.5}
  #allocation0 [shape = 'u32[]', space=smem, size = 0x4, offset = 0x4, fixed_abs, tag = 'smem constant byte address 0x4 - core index']
  #allocation1 [shape = 'u32[144,128]{1,0:T(1,128)}', space=vmem, size = 0x12000, scoped, tag = 'internal scratch']
  %s0 = inlined_call_operand.vmem [shape: f32[2,3072], index: 0, kind: input, shape index: {}]
  %s1 = inlined_call_operand.vmem [shape: f32[2,3072], index: 1, kind: output, shape index: {}]
  %s2 = sld [smem:[#allocation0]]
  $region14: #{_lambda_.5} parent=0
    _
  %s4 = ssub.s32 1, %s2
  %s5 = scalar_select 0, %s4, %s2
  // Predicated region
  $region2: #{_lambda_.5} parent=0 // pred_check
    _
  $region3: #{_lambda_.5} parent=0 // pred_check_branch
    %7 = sbr.rel (0) target = $region5
  $region4: #{_lambda_.5} parent=0 // pred_region
    _
  $region5: #{_lambda_.5} parent=0 // pred_fallthru
    _
  %v8 = vld [vmem:[%s0] sm:$0xff]
  %v9 = vld [vmem:[%s0 + $0x8] sm:$0xff]
  %v10 = vld [vmem:[%s0 + $0x10] sm:$0xff]
  %v11 = vld [vmem:[%s0 + $0x18] sm:$0xff]
  %v12 = vld [vmem:[%s0 + $0x20] sm:$0xff]
  %v13 = vld [vmem:[%s0 + $0x28] sm:$0xff]
  %v20 = vcombine.high %v8, %v8
  %v22 = vunpack.c.l.s4 1983009808
  %v23 = vunpack.c.0.s8 %v22
  %v24 = vlaneseq
  %v25 = vshrl.u32 %v24, 7
  %v26 = vsub.s32 %v23, %v25
  %v27 = vrot.slane %v8, %v26
  %v29 = vunpack.c.l.s4 1983009808
  %v30 = vunpack.c.0.s8 %v29
  %v31 = vlaneseq
  %v32 = vshrl.u32 %v31, 7
  %v33 = vsub.s32 %v30, %v32
  %v34 = vrot.slane %v20, %v33
  %v35 = vcombine.high %v27, %v27
  %v36 = vcombine.high %v34, %v34
  %v37 = vcombine.high %v9, %v9
  %v39 = vunpack.c.l.s4 1983009808
  %v40 = vunpack.c.0.s8 %v39
  %v41 = vlaneseq
  %v42 = vshrl.u32 %v41, 7
  %v43 = vsub.s32 %v40, %v42
  %v44 = vrot.slane %v9, %v43
  %v46 = vunpack.c.l.s4 1983009808
  %v47 = vunpack.c.0.s8 %v46
  %v48 = vlaneseq
  %v49 = vshrl.u32 %v48, 7
  %v50 = vsub.s32 %v47, %v49
  %v51 = vrot.slane %v37, %v50
  %v52 = vcombine.high %v44, %v44
  %v53 = vcombine.high %v51, %v51
  %v54 = vcombine.high %v10, %v10
  %v56 = vunpack.c.l.s4 1983009808
  %v57 = vunpack.c.0.s8 %v56
  %v58 = vlaneseq
  %v59 = vshrl.u32 %v58, 7
  %v60 = vsub.s32 %v57, %v59
  %v61 = vrot.slane %v10, %v60
  %v63 = vunpack.c.l.s4 1983009808
  %v64 = vunpack.c.0.s8 %v63
  %v65 = vlaneseq
  %v66 = vshrl.u32 %v65, 7
  %v67 = vsub.s32 %v64, %v66
  %v68 = vrot.slane %v54, %v67
  %v69 = vcombine.high %v61, %v61
  %v70 = vcombine.high %v68, %v68
  %v71 = vcombine.high %v11, %v11
  %v73 = vunpack.c.l.s4 1983009808
  %v74 = vunpack.c.0.s8 %v73
  %v75 = vlaneseq
  %v76 = vshrl.u32 %v75, 7
  %v77 = vsub.s32 %v74, %v76
  %v78 = vrot.slane %v11, %v77
  %v80 = vunpack.c.l.s4 1983009808
  %v81 = vunpack.c.0.s8 %v80
  %v82 = vlaneseq
  %v83 = vshrl.u32 %v82, 7
  %v84 = vsub.s32 %v81, %v83
  %v85 = vrot.slane %v71, %v84
  %v86 = vcombine.high %v78, %v78
  %v87 = vcombine.high %v85, %v85
  %v88 = vcombine.high %v12, %v12
  %v90 = vunpack.c.l.s4 1983009808
  %v91 = vunpack.c.0.s8 %v90
  %v92 = vlaneseq
  %v93 = vshrl.u32 %v92, 7
  %v94 = vsub.s32 %v91, %v93
  %v95 = vrot.slane %v12, %v94
  %v97 = vunpack.c.l.s4 1983009808
  %v98 = vunpack.c.0.s8 %v97
  %v99 = vlaneseq
  %v100 = vshrl.u32 %v99, 7
  %v101 = vsub.s32 %v98, %v100
  %v102 = vrot.slane %v88, %v101
  %v103 = vcombine.high %v95, %v95
  %v104 = vcombine.high %v102, %v102
  %v105 = vcombine.high %v13, %v13
  %v107 = vunpack.c.l.s4 1983009808
  %v108 = vunpack.c.0.s8 %v107
  %v109 = vlaneseq
  %v110 = vshrl.u32 %v109, 7
  %v111 = vsub.s32 %v108, %v110
  %v112 = vrot.slane %v13, %v111
  %v114 = vunpack.c.l.s4 1983009808
  %v115 = vunpack.c.0.s8 %v114
  %v116 = vlaneseq
  %v117 = vshrl.u32 %v116, 7
  %v118 = vsub.s32 %v115, %v117
  %v119 = vrot.slane %v105, %v118
  %v120 = vcombine.high %v112, %v112
  %v121 = vcombine.high %v119, %v119
  %vm146 = vcmask 1041408
  %v147 = vsel %vm146, %v27, 0.0
  %v148 = vsel %vm146, %v35, 0.0
  %v149 = vadd.f32 %v147, %v148
  %v150 = vsel %vm146, %v34, 0.0
  %v151 = vadd.f32 %v149, %v150
  %v152 = vsel %vm146, %v36, 0.0
  %v153 = vadd.f32 %v151, %v152
  %v154 = vsel %vm146, %v44, 0.0
  %v155 = vadd.f32 %v153, %v154
  %v156 = vsel %vm146, %v52, 0.0
  %v157 = vadd.f32 %v155, %v156
  %v158 = vsel %vm146, %v51, 0.0
  %v159 = vadd.f32 %v157, %v158
  %v160 = vsel %vm146, %v53, 0.0
  %v161 = vadd.f32 %v159, %v160
  %v162 = vsel %vm146, %v61, 0.0
  %v163 = vadd.f32 %v161, %v162
  %v164 = vsel %vm146, %v69, 0.0
  %v165 = vadd.f32 %v163, %v164
  %v166 = vsel %vm146, %v68, 0.0
  %v167 = vadd.f32 %v165, %v166
  %v168 = vsel %vm146, %v70, 0.0
  %v169 = vadd.f32 %v167, %v168
  %v170 = vsel %vm146, %v78, 0.0
  %v171 = vadd.f32 %v169, %v170
  %v172 = vsel %vm146, %v86, 0.0
  %v173 = vadd.f32 %v171, %v172
  %v174 = vsel %vm146, %v85, 0.0
  %v175 = vadd.f32 %v173, %v174
  %v176 = vsel %vm146, %v87, 0.0
  %v177 = vadd.f32 %v175, %v176
  %v178 = vsel %vm146, %v95, 0.0
  %v179 = vadd.f32 %v177, %v178
  %v180 = vsel %vm146, %v103, 0.0
  %v181 = vadd.f32 %v179, %v180
  %v182 = vsel %vm146, %v102, 0.0
  %v183 = vadd.f32 %v181, %v182
  %v184 = vsel %vm146, %v104, 0.0
  %v185 = vadd.f32 %v183, %v184
  %v186 = vsel %vm146, %v112, 0.0
  %v187 = vadd.f32 %v185, %v186
  %v188 = vsel %vm146, %v120, 0.0
  %v189 = vadd.f32 %v187, %v188
  %v190 = vsel %vm146, %v119, 0.0
  %v191 = vadd.f32 %v189, %v190
  %v192 = vsel %vm146, %v121, 0.0
  %v193 = vadd.f32 %v191, %v192
  %194 = vadd.xlane.f32.xlu0 %v193
  %v195 = vpop.xlane.xlu0 %194
  %v196 = vrcp.pop 3072.0
  %v197 = vmul.f32 %v195, %v196
  %v200 = vunpack.c.l.s4 269488144
  %v201 = vunpack.c.0.s8 %v200
  %v202 = vlaneseq
  %v203 = vshrl.u32 %v202, 7
  %v204 = vsub.s32 %v201, %v203
  %v205 = vrot.slane %v197, %v204
  %v207 = vsub.f32 %v8, %v205
  %v208 = vsub.f32 %v9, %v205
  %v209 = vsub.f32 %v10, %v205
  %v210 = vsub.f32 %v11, %v205
  %v211 = vsub.f32 %v12, %v205
  %v212 = vsub.f32 %v13, %v205
  %v213 = vmul.f32 %v207, %v207
  %v214 = vmul.f32 %v208, %v208
  %v215 = vmul.f32 %v209, %v209
  %v216 = vmul.f32 %v210, %v210
  %v217 = vmul.f32 %v211, %v211
  %v218 = vmul.f32 %v212, %v212
  %v225 = vcombine.high %v213, %v213
  %v227 = vunpack.c.l.s4 1983009808
  %v228 = vunpack.c.0.s8 %v227
  %v229 = vlaneseq
  %v230 = vshrl.u32 %v229, 7
  %v231 = vsub.s32 %v228, %v230
  %v232 = vrot.slane %v213, %v231
  %v234 = vunpack.c.l.s4 1983009808
  %v235 = vunpack.c.0.s8 %v234
  %v236 = vlaneseq
  %v237 = vshrl.u32 %v236, 7
  %v238 = vsub.s32 %v235, %v237
  %v239 = vrot.slane %v225, %v238
  %v240 = vcombine.high %v232, %v232
  %v241 = vcombine.high %v239, %v239
  %v242 = vcombine.high %v214, %v214
  %v244 = vunpack.c.l.s4 1983009808
  %v245 = vunpack.c.0.s8 %v244
  %v246 = vlaneseq
  %v247 = vshrl.u32 %v246, 7
  %v248 = vsub.s32 %v245, %v247
  %v249 = vrot.slane %v214, %v248
  %v251 = vunpack.c.l.s4 1983009808
  %v252 = vunpack.c.0.s8 %v251
  %v253 = vlaneseq
  %v254 = vshrl.u32 %v253, 7
  %v255 = vsub.s32 %v252, %v254
  %v256 = vrot.slane %v242, %v255
  %v257 = vcombine.high %v249, %v249
  %v258 = vcombine.high %v256, %v256
  %v259 = vcombine.high %v215, %v215
  %v261 = vunpack.c.l.s4 1983009808
  %v262 = vunpack.c.0.s8 %v261
  %v263 = vlaneseq
  %v264 = vshrl.u32 %v263, 7
  %v265 = vsub.s32 %v262, %v264
  %v266 = vrot.slane %v215, %v265
  %v268 = vunpack.c.l.s4 1983009808
  %v269 = vunpack.c.0.s8 %v268
  %v270 = vlaneseq
  %v271 = vshrl.u32 %v270, 7
  %v272 = vsub.s32 %v269, %v271
  %v273 = vrot.slane %v259, %v272
  %v274 = vcombine.high %v266, %v266
  %v275 = vcombine.high %v273, %v273
  %v276 = vcombine.high %v216, %v216
  %v278 = vunpack.c.l.s4 1983009808
  %v279 = vunpack.c.0.s8 %v278
  %v280 = vlaneseq
  %v281 = vshrl.u32 %v280, 7
  %v282 = vsub.s32 %v279, %v281
  %v283 = vrot.slane %v216, %v282
  %v285 = vunpack.c.l.s4 1983009808
  %v286 = vunpack.c.0.s8 %v285
  %v287 = vlaneseq
  %v288 = vshrl.u32 %v287, 7
  %v289 = vsub.s32 %v286, %v288
  %v290 = vrot.slane %v276, %v289
  %v291 = vcombine.high %v283, %v283
  %v292 = vcombine.high %v290, %v290
  %v293 = vcombine.high %v217, %v217
  %v295 = vunpack.c.l.s4 1983009808
  %v296 = vunpack.c.0.s8 %v295
  %v297 = vlaneseq
  %v298 = vshrl.u32 %v297, 7
  %v299 = vsub.s32 %v296, %v298
  %v300 = vrot.slane %v217, %v299
  %v302 = vunpack.c.l.s4 1983009808
  %v303 = vunpack.c.0.s8 %v302
  %v304 = vlaneseq
  %v305 = vshrl.u32 %v304, 7
  %v306 = vsub.s32 %v303, %v305
  %v307 = vrot.slane %v293, %v306
  %v308 = vcombine.high %v300, %v300
  %v309 = vcombine.high %v307, %v307
  %v310 = vcombine.high %v218, %v218
  %v312 = vunpack.c.l.s4 1983009808
  %v313 = vunpack.c.0.s8 %v312
  %v314 = vlaneseq
  %v315 = vshrl.u32 %v314, 7
  %v316 = vsub.s32 %v313, %v315
  %v317 = vrot.slane %v218, %v316
  %v319 = vunpack.c.l.s4 1983009808
  %v320 = vunpack.c.0.s8 %v319
  %v321 = vlaneseq
  %v322 = vshrl.u32 %v321, 7
  %v323 = vsub.s32 %v320, %v322
  %v324 = vrot.slane %v310, %v323
  %v325 = vcombine.high %v317, %v317
  %v326 = vcombine.high %v324, %v324
  %v351 = vsel %vm146, %v232, 0.0
  %v352 = vsel %vm146, %v240, 0.0
  %v353 = vadd.f32 %v351, %v352
  %v354 = vsel %vm146, %v239, 0.0
  %v355 = vadd.f32 %v353, %v354
  %v356 = vsel %vm146, %v241, 0.0
  %v357 = vadd.f32 %v355, %v356
  %v358 = vsel %vm146, %v249, 0.0
  %v359 = vadd.f32 %v357, %v358
  %v360 = vsel %vm146, %v257, 0.0
  %v361 = vadd.f32 %v359, %v360
  %v362 = vsel %vm146, %v256, 0.0
  %v363 = vadd.f32 %v361, %v362
  %v364 = vsel %vm146, %v258, 0.0
  %v365 = vadd.f32 %v363, %v364
  %v366 = vsel %vm146, %v266, 0.0
  %v367 = vadd.f32 %v365, %v366
  %v368 = vsel %vm146, %v274, 0.0
  %v369 = vadd.f32 %v367, %v368
  %v370 = vsel %vm146, %v273, 0.0
  %v371 = vadd.f32 %v369, %v370
  %v372 = vsel %vm146, %v275, 0.0
  %v373 = vadd.f32 %v371, %v372
  %v374 = vsel %vm146, %v283, 0.0
  %v375 = vadd.f32 %v373, %v374
  %v376 = vsel %vm146, %v291, 0.0
  %v377 = vadd.f32 %v375, %v376
  %v378 = vsel %vm146, %v290, 0.0
  %v379 = vadd.f32 %v377, %v378
  %v380 = vsel %vm146, %v292, 0.0
  %v381 = vadd.f32 %v379, %v380
  %v382 = vsel %vm146, %v300, 0.0
  %v383 = vadd.f32 %v381, %v382
  %v384 = vsel %vm146, %v308, 0.0
  %v385 = vadd.f32 %v383, %v384
  %v386 = vsel %vm146, %v307, 0.0
  %v387 = vadd.f32 %v385, %v386
  %v388 = vsel %vm146, %v309, 0.0
  %v389 = vadd.f32 %v387, %v388
  %v390 = vsel %vm146, %v317, 0.0
  %v391 = vadd.f32 %v389, %v390
  %v392 = vsel %vm146, %v325, 0.0
  %v393 = vadd.f32 %v391, %v392
  %v394 = vsel %vm146, %v324, 0.0
  %v395 = vadd.f32 %v393, %v394
  %v396 = vsel %vm146, %v326, 0.0
  %v397 = vadd.f32 %v395, %v396
  %398 = vadd.xlane.f32.xlu0 %v397
  %v399 = vpop.xlane.xlu0 %398
  %v400 = vmul.f32 %v399, 0.00032562684
  %v401 = vrsqrt.pop %v400
  %v402 = vmul.f32 %v400, %v401
  %vm403 = vcmp.eq.f32.partialorder %v400, inf
  %v404 = vsel %vm403, %v400, %v402
  %vm405 = vcmp.eq.f32.partialorder %v400, 0.0
  %v406 = vand.u32 %v400, 2147483648
  %v407 = vsel %vm405, %v406, %v404
  %v408 = vadd.f32 %v407, 1e-07
  %v411 = vunpack.c.l.s4 269488144
  %v412 = vunpack.c.0.s8 %v411
  %v413 = vlaneseq
  %v414 = vshrl.u32 %v413, 7
  %v415 = vsub.s32 %v412, %v414
  %v416 = vrot.slane %v408, %v415
  %v418 = vrcp.pop %v416
  %v419 = vmul.f32 %v207, %v418
  %v420 = vmul.f32 %v208, %v418
  %v421 = vmul.f32 %v209, %v418
  %v422 = vmul.f32 %v210, %v418
  %v423 = vmul.f32 %v211, %v418
  %v424 = vmul.f32 %v212, %v418
  %425 = vst [vmem:[%s1] sm:$0xff] %v419
  %426 = vst [vmem:[%s1 + $0x8] sm:$0xff] %v420
  %427 = vst [vmem:[%s1 + $0x10] sm:$0xff] %v421
  %428 = vst [vmem:[%s1 + $0x18] sm:$0xff] %v422
  %429 = vst [vmem:[%s1 + $0x20] sm:$0xff] %v423
  %430 = vst [vmem:[%s1 + $0x28] sm:$0xff] %v424
  // Predicated region
  $region6: #{_lambda_.5} parent=0 // pred_check
    _
  $region7: #{_lambda_.5} parent=0 // pred_check_branch
    %432 = sbr.rel (0) target = $region9
  $region8: #{_lambda_.5} parent=0 // pred_region
    _
  $region9: #{_lambda_.5} parent=0 // pred_fallthru
    _
  // Predicated region
  $region10: #{_lambda_.5} parent=0 // pred_check
    _
  $region11: #{_lambda_.5} parent=0 // pred_check_branch
    %434 = sbr.rel (0) target = $region13
  $region12: #{_lambda_.5} parent=0 // pred_region
    _
  $region13: #{_lambda_.5} parent=0 // pred_fallthru
    _

// kernel: _lambda_.6
$region0: #{_lambda_.6}
  #allocation0 [shape = 'u32[]', space=smem, size = 0x4, offset = 0x4, fixed_abs, tag = 'smem constant byte address 0x4 - core index']
  #allocation1 [shape = 'u32[144,128]{1,0:T(1,128)}', space=vmem, size = 0x12000, scoped, tag = 'internal scratch']
  %s0 = inlined_call_operand.vmem [shape: bf16[512,128], index: 0, kind: input, shape index: {}]
  %s1 = inlined_call_operand.vmem [shape: bf16[128,128], index: 1, kind: input, shape index: {}]
  %s2 = inlined_call_operand.vmem [shape: f32[2,128], index: 2, kind: input, shape index: {}]
  %s3 = inlined_call_operand.vmem [shape: f32[512,128], index: 3, kind: output, shape index: {}]
  %s4 = sld [smem:[#allocation0]]
  $region45: #{_lambda_.6} parent=0
    _
  %s6 = ssub.s32 1, %s4
  %s7 = scalar_select 0, %s6, %s4
  loop: start=0, step=1, limit=6
  $region2: #{_lambda_.6} parent=0 // loop_pre_header
    _
  $region3: #{_lambda_.6} parent=0 // loop_header
    %s9 = sphi 0, %s13
    %p10 = scmp.ge.s32.totalorder %s9, 6
    %s19 = sphi 0, %s21
    %s22 = sphi 0, %s19
    %s23 = sphi 0, %s22
    %s39 = sphi 0, %s23
    %s43 = sphi 0, %s43
    %s45 = sphi 0, %s43
    %s46 = sphi 0, %s45
    %s60 = sphi 0, %s46
    %s64 = sphi 0, %s64
    %s66 = sphi 0, %s64
    %s67 = sphi 0, %s66
    %s81 = sphi 0, %s67
    %s87 = sphi 0, %s89
    %s90 = sphi 0, %s87
    %s91 = sphi 0, %s90
    %s107 = sphi 0, %s91
  $region4: #{_lambda_.6} parent=0 // loop_header_branch
    %12 = sbr.rel (%p10) target = $region8
  $region5: #{_lambda_.6} parent=0 // loop_body
    %s14 = ssub.s32 %s9, 1
    %s15 = ssub.s32 %s9, 2
    %s16 = sadd.s32 %s9, 1
    %s17 = ssub.s32 %s9, %s16
    %p18 = scmp.eq.s32.totalorder %s17, 0
    %s20 = sadd.s32 %s19, 1
    %s21 = scalar_select %p18, %s19, %s20
    %p24 = pneg %p18
    %p25 = scmp.eq.s32.totalorder %s9, 3
    %p26 = por %p24, %p25
    %p27 = scmp.ne.s32.totalorder %s19, %s22
    %p28 = scmp.eq.s32.totalorder %s9, 0
    %p29 = por %p27, %p28
    %p30 = scmp.ne.s32.totalorder %s19, %s22
    %p31 = scmp.eq.s32.totalorder %s14, 3
    %p32 = por %p30, %p31
    %p33 = scmp.ne.s32.totalorder %s22, %s23
    %p34 = scmp.eq.s32.totalorder %s14, 0
    %p35 = por %p33, %p34
    %p36 = scmp.ne.s32.totalorder %s22, %s23
    %p37 = scmp.eq.s32.totalorder %s15, 3
    %p38 = por %p36, %p37
    %p40 = scmp.ne.s32.totalorder %s23, %s39
    %p41 = scmp.eq.s32.totalorder %s15, 0
    %p42 = por %p40, %p41
    %s44 = sadd.s32 %s43, 1
    %p47 = scmp.eq.s32.totalorder %s9, 3
    %p48 = scmp.ne.s32.totalorder %s43, %s45
    %p49 = scmp.eq.s32.totalorder %s9, 0
    %p50 = por %p48, %p49
    %p51 = scmp.ne.s32.totalorder %s43, %s45
    %p52 = scmp.eq.s32.totalorder %s14, 3
    %p53 = por %p51, %p52
    %p54 = scmp.ne.s32.totalorder %s45, %s46
    %p55 = scmp.eq.s32.totalorder %s14, 0
    %p56 = por %p54, %p55
    %p57 = scmp.ne.s32.totalorder %s45, %s46
    %p58 = scmp.eq.s32.totalorder %s15, 3
    %p59 = por %p57, %p58
    %p61 = scmp.ne.s32.totalorder %s46, %s60
    %p62 = scmp.eq.s32.totalorder %s15, 0
    %p63 = por %p61, %p62
    %s65 = sadd.s32 %s64, 1
    %p68 = scmp.eq.s32.totalorder %s9, 3
    %p69 = scmp.ne.s32.totalorder %s64, %s66
    %p70 = scmp.eq.s32.totalorder %s9, 0
    %p71 = por %p69, %p70
    %p72 = scmp.ne.s32.totalorder %s64, %s66
    %p73 = scmp.eq.s32.totalorder %s14, 3
    %p74 = por %p72, %p73
    %p75 = scmp.ne.s32.totalorder %s66, %s67
    %p76 = scmp.eq.s32.totalorder %s14, 0
    %p77 = por %p75, %p76
    %p78 = scmp.ne.s32.totalorder %s66, %s67
    %p79 = scmp.eq.s32.totalorder %s15, 3
    %p80 = por %p78, %p79
    %p82 = scmp.ne.s32.totalorder %s67, %s81
    %p83 = scmp.eq.s32.totalorder %s15, 0
    %p84 = por %p82, %p83
    %s85 = ssub.s32 %s9, %s16
    %p86 = scmp.eq.s32.totalorder %s85, 0
    %s88 = sadd.s32 %s87, 1
    %s89 = scalar_select %p86, %s87, %s88
    %p92 = pneg %p86
    %p93 = scmp.eq.s32.totalorder %s9, 3
    %p94 = por %p92, %p93
    %p95 = scmp.ne.s32.totalorder %s87, %s90
    %p96 = scmp.eq.s32.totalorder %s9, 0
    %p97 = por %p95, %p96
    %p98 = scmp.ne.s32.totalorder %s87, %s90
    %p99 = scmp.eq.s32.totalorder %s14, 3
    %p100 = por %p98, %p99
    %p101 = scmp.ne.s32.totalorder %s90, %s91
    %p102 = scmp.eq.s32.totalorder %s14, 0
    %p103 = por %p101, %p102
    %p104 = scmp.ne.s32.totalorder %s90, %s91
    %p105 = scmp.eq.s32.totalorder %s15, 3
    %p106 = por %p104, %p105
    %p108 = scmp.ne.s32.totalorder %s91, %s107
    %p109 = scmp.eq.s32.totalorder %s15, 0
    %p110 = por %p108, %p109
    %p111 = scmp.le.s32.totalorder 1, %s9
    %p112 = scmp.lt.s32.totalorder %s9, 5
    %p113 = pnand %p111, %p112
    %p114 = pneg %p113
    // Predicated region
    $region9: #{_lambda_.6} parent=5 // pred_check
      _
    $region10: #{_lambda_.6} parent=5 // pred_check_branch
      %116 = sbr.rel (%p113) target = $region12
    $region11: #{_lambda_.6} parent=5 // pred_region
      %s117 = ssub.s32 %s9, 1
      // Predicated region
      $region13: #{_lambda_.6} parent=11 // pred_check
        %p118 = pneg %p56
      $region14: #{_lambda_.6} parent=11 // pred_check_branch
        %120 = sbr.rel (%p118) target = $region16
      $region15: #{_lambda_.6} parent=11 // pred_region
        _
      $region16: #{_lambda_.6} parent=11 // pred_fallthru
        _
      // Predicated region
      $region17: #{_lambda_.6} parent=11 // pred_check
        %p121 = pneg %p77
      $region18: #{_lambda_.6} parent=11 // pred_check_branch
        %123 = sbr.rel (%p121) target = $region20
      $region19: #{_lambda_.6} parent=11 // pred_region
        _
      $region20: #{_lambda_.6} parent=11 // pred_fallthru
        _
    $region12: #{_lambda_.6} parent=5 // pred_fallthru
      _
    %p124 = scmp.lt.s32.totalorder %s9, 4
    // Predicated region
    $region21: #{_lambda_.6} parent=5 // pred_check
      %p125 = pneg %p124
    $region22: #{_lambda_.6} parent=5 // pred_check_branch
      %127 = sbr.rel (%p125) target = $region24
    $region23: #{_lambda_.6} parent=5 // pred_region
      // Predicated region
      $region25: #{_lambda_.6} parent=23 // pred_check
        %p128 = pneg %p29
      $region26: #{_lambda_.6} parent=23 // pred_check_branch
        %130 = sbr.rel (%p128) target = $region28
      $region27: #{_lambda_.6} parent=23 // pred_region
        %s131 = smul.u32 16, %s9
        %p132 = scmp.lt.s32.totalorder %s131, 63
        %s133 = scalar_select %p132, %s131, 63
        %s134 = smul.addr %s133, 4
        %s135 = scalar_lea.vmem %s0, %s134
        %s136 = smul.u32 16, %s9
      $region28: #{_lambda_.6} parent=23 // pred_fallthru
        _
    $region24: #{_lambda_.6} parent=5 // pred_fallthru
      _
    %p137 = scmp.le.s32.totalorder 1, %s9
    %p138 = scmp.lt.s32.totalorder %s9, 5
    %p139 = pnand %p137, %p138
    %p140 = pneg %p139
    // Predicated region
    $region29: #{_lambda_.6} parent=5 // pred_check
      _
    $region30: #{_lambda_.6} parent=5 // pred_check_branch
      %142 = sbr.rel (%p139) target = $region32
    $region31: #{_lambda_.6} parent=5 // pred_region
      %s143 = ssub.s32 %s9, 1
      %s144 = smul.u32 16, %s14
      %p145 = scmp.lt.s32.totalorder %s144, 63
      %s146 = scalar_select %p145, %s144, 63
      %s147 = smul.addr %s146, 4
      %s148 = scalar_lea.vmem %s0, %s147
      %p149 = pneg %p35
      %p150 = pneg %p32
      %p151 = pneg %p56
      %p152 = pneg %p53
      %p153 = pneg %p77
      %p154 = pneg %p74
      %p155 = pneg %p103
      %p156 = pneg %p100
      %s157 = smul.u32 16, %s14
      %p158 = scmp.lt.s32.totalorder %s157, 63
      %s159 = scalar_select %p158, %s157, 63
      %s160 = smul.addr %s159, 8
      %s161 = scalar_lea.vmem %s3, %s160
      %s162 = smul.u32 16, %s14
      %p163 = scmp.lt.s32.totalorder %s162, 63
      %s164 = scalar_select %p163, %s162, 63
      %s165 = smul.addr %s164, 4
      %s166 = scalar_lea.vmem %s0, %s165
      %s167 = smul.u32 16, %s14
      %s168 = smul.u32 16, %s14
      %p169 = scmp.lt.s32.totalorder %s168, 63
      %s170 = scalar_select %p169, %s168, 63
      %s171 = smul.addr %s170, 8
      %s172 = scalar_lea.vmem %s3, %s171
      %s173 = smul.u32 16, %s14
      %v175 = vld [vmem:[%s166] sm:$0xf]
      %v176 = vld [vmem:[%s166 + $0x4] sm:$0xf]
      %v177 = vld [vmem:[%s166 + $0x8] sm:$0xf]
      %v178 = vld [vmem:[%s166 + $0xc] sm:$0xf]
      %v179 = vld [vmem:[%s166 + $0x10] sm:$0xf]
      %v180 = vld [vmem:[%s166 + $0x14] sm:$0xf]
      %v181 = vld [vmem:[%s166 + $0x18] sm:$0xf]
      %v182 = vld [vmem:[%s166 + $0x1c] sm:$0xf]
      %v183 = vld [vmem:[%s166 + $0x20] sm:$0xf]
      %v184 = vld [vmem:[%s166 + $0x24] sm:$0xf]
      %v185 = vld [vmem:[%s166 + $0x28] sm:$0xf]
      %v186 = vld [vmem:[%s166 + $0x2c] sm:$0xf]
      %v187 = vld [vmem:[%s166 + $0x30] sm:$0xf]
      %v188 = vld [vmem:[%s166 + $0x34] sm:$0xf]
      %v189 = vld [vmem:[%s166 + $0x38] sm:$0xf]
      %v190 = vld [vmem:[%s166 + $0x3c] sm:$0xf]
      %v191 = vld [vmem:[%s1] sm:$0xf]
      %v192 = vld [vmem:[%s1 + $0x4] sm:$0xf]
      %v193 = vld [vmem:[%s1 + $0x8] sm:$0xf]
      %v194 = vld [vmem:[%s1 + $0xc] sm:$0xf]
      %v195 = vld [vmem:[%s1 + $0x10] sm:$0xf]
      %v196 = vld [vmem:[%s1 + $0x14] sm:$0xf]
      %v197 = vld [vmem:[%s1 + $0x18] sm:$0xf]
      %v198 = vld [vmem:[%s1 + $0x1c] sm:$0xf]
      %v199 = vld [vmem:[%s1 + $0x20] sm:$0xf]
      %v200 = vld [vmem:[%s1 + $0x24] sm:$0xf]
      %v201 = vld [vmem:[%s1 + $0x28] sm:$0xf]
      %v202 = vld [vmem:[%s1 + $0x2c] sm:$0xf]
      %v203 = vld [vmem:[%s1 + $0x30] sm:$0xf]
      %v204 = vld [vmem:[%s1 + $0x34] sm:$0xf]
      %v205 = vld [vmem:[%s1 + $0x38] sm:$0xf]
      %v206 = vld [vmem:[%s1 + $0x3c] sm:$0xf]
      %v223 = vunpack.c.l.b16 %v175
      %v224 = vunpack.c.l.b16 %v176
      %v225 = vunpack.c.l.b16 %v177
      %v226 = vunpack.c.l.b16 %v178
      %v227 = vunpack.c.l.b16 %v179
      %v228 = vunpack.c.l.b16 %v180
      %v229 = vunpack.c.l.b16 %v181
      %v230 = vunpack.c.l.b16 %v182
      %v231 = vunpack.c.l.b16 %v183
      %v232 = vunpack.c.l.b16 %v184
      %v233 = vunpack.c.l.b16 %v185
      %v234 = vunpack.c.l.b16 %v186
      %v235 = vunpack.c.l.b16 %v187
      %v236 = vunpack.c.l.b16 %v188
      %v237 = vunpack.c.l.b16 %v189
      %v238 = vunpack.c.l.b16 %v190
      %v239 = vpack.c.b16 %v224, %v223
      %v240 = vpack.c.b16 %v226, %v225
      %v241 = vpack.c.b16 %v228, %v227
      %v242 = vpack.c.b16 %v230, %v229
      %v243 = vpack.c.b16 %v232, %v231
      %v244 = vpack.c.b16 %v234, %v233
      %v245 = vpack.c.b16 %v236, %v235
      %v246 = vpack.c.b16 %v238, %v237
      %v271 = vunpack.c.l.b16 %v191
      %v272 = vunpack.c.l.b16 %v192
      %v273 = vunpack.c.l.b16 %v193
      %v274 = vunpack.c.l.b16 %v194
      %v275 = vunpack.c.l.b16 %v195
      %v276 = vunpack.c.l.b16 %v196
      %v277 = vunpack.c.l.b16 %v197
      %v278 = vunpack.c.l.b16 %v198
      %v279 = vunpack.c.l.b16 %v199
      %v280 = vunpack.c.l.b16 %v200
      %v281 = vunpack.c.l.b16 %v201
      %v282 = vunpack.c.l.b16 %v202
      %v283 = vunpack.c.l.b16 %v203
      %v284 = vunpack.c.l.b16 %v204
      %v285 = vunpack.c.l.b16 %v205
      %v286 = vunpack.c.l.b16 %v206
      %v287 = vpack.c.b16 %v272, %v271
      %v288 = vpack.c.b16 %v274, %v273
      %v289 = vpack.c.b16 %v276, %v275
      %v290 = vpack.c.b16 %v278, %v277
      %v291 = vpack.c.b16 %v280, %v279
      %v292 = vpack.c.b16 %v282, %v281
      %v293 = vpack.c.b16 %v284, %v283
      %v294 = vpack.c.b16 %v286, %v285
      %303 = vmatprep.subr.bf16.mxu0 0
      %304 = vmatpush1.bf16.msra.mxu0 %v287
      %305 = vmatprep.subr.bf16.mxu0 0
      %306 = vmatpush1.bf16.msra.mxu0 %v288
      %307 = vmatprep.subr.bf16.mxu0 0
      %308 = vmatpush1.bf16.msra.mxu0 %v289
      %309 = vmatprep.subr.bf16.mxu0 0
      %310 = vmatpush1.bf16.msra.mxu0 %v290
      %311 = vmatprep.subr.bf16.mxu0 0
      %312 = vmatpush1.bf16.msra.mxu0 %v291
      %313 = vmatprep.subr.bf16.mxu0 0
      %314 = vmatpush1.bf16.msra.mxu0 %v292
      %315 = vmatprep.subr.bf16.mxu0 0
      %316 = vmatpush1.bf16.msra.mxu0 %v293
      %317 = vmatprep.subr.bf16.mxu0 0
      %318 = vmatpush1.bf16.msra.mxu0 %v294
      %319 = vmatprep.subr.bf16.mxu0 0
      %320 = vmatpush1.bf16.msra.mxu0 0
      %321 = vmatprep.subr.bf16.mxu0 0
      %322 = vmatpush1.bf16.msra.mxu0 0
      %323 = vmatprep.subr.bf16.mxu0 0
      %324 = vmatpush1.bf16.msra.mxu0 0
      %325 = vmatprep.subr.bf16.mxu0 0
      %326 = vmatpush1.bf16.msra.mxu0 0
      %327 = vmatprep.subr.bf16.mxu0 0
      %328 = vmatpush1.bf16.msra.mxu0 0
      %329 = vmatprep.subr.bf16.mxu0 0
      %330 = vmatpush1.bf16.msra.mxu0 0
      %331 = vmatprep.subr.bf16.mxu0 0
      %332 = vmatpush1.bf16.msra.mxu0 0
      %333 = vmatprep.subr.bf16.mxu0 0
      %334 = vmatpush1.bf16.msra.mxu0 0
      %335 = vmatprep.mubr.bf16.mxu0 0
      %336 = vmatmul.mubr.bf16.gmra.mrb[0].mxu0 %v239
      %v337 = vpop.f32.mrb[0].mxu0
      %v338 = vadd.f32 0.0, %v337
      %v339 = vpop.f32.mrb[0].mxu0
      %v340 = vpop.f32.mrb[0].mxu0
      %v341 = vadd.f32 0.0, %v340
      %v342 = vpop.f32.mrb[0].mxu0
      %343 = vmatprep.mubr.bf16.mxu0 0
      %344 = vmatmul.mubr.bf16.gmra.mrb[0].mxu0 %v240
      %v345 = vpop.f32.mrb[0].mxu0
      %v346 = vadd.f32 0.0, %v345
      %v347 = vpop.f32.mrb[0].mxu0
      %v348 = vpop.f32.mrb[0].mxu0
      %v349 = vadd.f32 0.0, %v348
      %v350 = vpop.f32.mrb[0].mxu0
      %351 = vmatprep.mubr.bf16.mxu0 0
      %352 = vmatmul.mubr.bf16.gmra.mrb[0].mxu0 %v241
      %v353 = vpop.f32.mrb[0].mxu0
      %v354 = vadd.f32 0.0, %v353
      %v355 = vpop.f32.mrb[0].mxu0
      %v356 = vpop.f32.mrb[0].mxu0
      %v357 = vadd.f32 0.0, %v356
      %v358 = vpop.f32.mrb[0].mxu0
      %359 = vmatprep.mubr.bf16.mxu0 0
      %360 = vmatmul.mubr.bf16.gmra.mrb[0].mxu0 %v242
      %v361 = vpop.f32.mrb[0].mxu0
      %v362 = vadd.f32 0.0, %v361
      %v363 = vpop.f32.mrb[0].mxu0
      %v364 = vpop.f32.mrb[0].mxu0
      %v365 = vadd.f32 0.0, %v364
      %v366 = vpop.f32.mrb[0].mxu0
      %367 = vmatprep.mubr.bf16.mxu0 0
      %368 = vmatmul.mubr.bf16.gmra.mrb[0].mxu0 %v243
      %v369 = vpop.f32.mrb[0].mxu0
      %v370 = vadd.f32 0.0, %v369
      %v371 = vpop.f32.mrb[0].mxu0
      %v372 = vpop.f32.mrb[0].mxu0
      %v373 = vadd.f32 0.0, %v372
      %v374 = vpop.f32.mrb[0].mxu0
      %375 = vmatprep.mubr.bf16.mxu0 0
      %376 = vmatmul.mubr.bf16.gmra.mrb[0].mxu0 %v244
      %v377 = vpop.f32.mrb[0].mxu0
      %v378 = vadd.f32 0.0, %v377
      %v379 = vpop.f32.mrb[0].mxu0
      %v380 = vpop.f32.mrb[0].mxu0
      %v381 = vadd.f32 0.0, %v380
      %v382 = vpop.f32.mrb[0].mxu0
      %383 = vmatprep.mubr.bf16.mxu0 0
      %384 = vmatmul.mubr.bf16.gmra.mrb[0].mxu0 %v245
      %v385 = vpop.f32.mrb[0].mxu0
      %v386 = vadd.f32 0.0, %v385
      %v387 = vpop.f32.mrb[0].mxu0
      %v388 = vpop.f32.mrb[0].mxu0
      %v389 = vadd.f32 0.0, %v388
      %v390 = vpop.f32.mrb[0].mxu0
      %391 = vmatprep.mubr.bf16.mxu0 0
      %392 = vmatmul.mubr.bf16.gmra.mrb[0].mxu0 %v246
      %v393 = vpop.f32.mrb[0].mxu0
      %v394 = vadd.f32 0.0, %v393
      %v395 = vpop.f32.mrb[0].mxu0
      %v396 = vpop.f32.mrb[0].mxu0
      %v397 = vadd.f32 0.0, %v396
      %v398 = vpop.f32.mrb[0].mxu0
      %399 = vdwg.mxu0
      %v400 = vld [vmem:[%s2] sm:$0x1]
      %v401 = vlaneseq
      %v402 = vshrl.u32 %v401, 7
      %v403 = vsub.s32 0, %v402
      %v404 = vrot.slane %v400, %v403
      %v405 = vmul.f32 %v338, %v404
      %v406 = vmul.f32 %v341, %v404
      %v407 = vmul.f32 %v346, %v404
      %v408 = vmul.f32 %v349, %v404
      %v409 = vmul.f32 %v354, %v404
      %v410 = vmul.f32 %v357, %v404
      %v411 = vmul.f32 %v362, %v404
      %v412 = vmul.f32 %v365, %v404
      %v413 = vmul.f32 %v370, %v404
      %v414 = vmul.f32 %v373, %v404
      %v415 = vmul.f32 %v378, %v404
      %v416 = vmul.f32 %v381, %v404
      %v417 = vmul.f32 %v386, %v404
      %v418 = vmul.f32 %v389, %v404
      %v419 = vmul.f32 %v394, %v404
      %v420 = vmul.f32 %v397, %v404
      %v421 = vld [vmem:[%s2 + $0x1] sm:$0x1]
      %v422 = vlaneseq
      %v423 = vshrl.u32 %v422, 7
      %v424 = vsub.s32 0, %v423
      %v425 = vrot.slane %v421, %v424
      %v426 = vadd.f32 %v405, %v425
      %v427 = vadd.f32 %v406, %v425
      %v428 = vadd.f32 %v407, %v425
      %v429 = vadd.f32 %v408, %v425
      %v430 = vadd.f32 %v409, %v425
      %v431 = vadd.f32 %v410, %v425
      %v432 = vadd.f32 %v411, %v425
      %v433 = vadd.f32 %v412, %v425
      %v434 = vadd.f32 %v413, %v425
      %v435 = vadd.f32 %v414, %v425
      %v436 = vadd.f32 %v415, %v425
      %v437 = vadd.f32 %v416, %v425
      %v438 = vadd.f32 %v417, %v425
      %v439 = vadd.f32 %v418, %v425
      %v440 = vadd.f32 %v419, %v425
      %v441 = vadd.f32 %v420, %v425
      %v442 = vmax.f32 %v426, 0.0
      %v443 = vmax.f32 %v427, 0.0
      %v444 = vmax.f32 %v428, 0.0
      %v445 = vmax.f32 %v429, 0.0
      %v446 = vmax.f32 %v430, 0.0
      %v447 = vmax.f32 %v431, 0.0
      %v448 = vmax.f32 %v432, 0.0
      %v449 = vmax.f32 %v433, 0.0
      %v450 = vmax.f32 %v434, 0.0
      %v451 = vmax.f32 %v435, 0.0
      %v452 = vmax.f32 %v436, 0.0
      %v453 = vmax.f32 %v437, 0.0
      %v454 = vmax.f32 %v438, 0.0
      %v455 = vmax.f32 %v439, 0.0
      %v456 = vmax.f32 %v440, 0.0
      %v457 = vmax.f32 %v441, 0.0
      %458 = vst [vmem:[%s172] sm:$0xff] %v442
      %459 = vst [vmem:[%s172 + $0x8] sm:$0xff] %v443
      %460 = vst [vmem:[%s172 + $0x10] sm:$0xff] %v444
      %461 = vst [vmem:[%s172 + $0x18] sm:$0xff] %v445
      %462 = vst [vmem:[%s172 + $0x20] sm:$0xff] %v446
      %463 = vst [vmem:[%s172 + $0x28] sm:$0xff] %v447
      %464 = vst [vmem:[%s172 + $0x30] sm:$0xff] %v448
      %465 = vst [vmem:[%s172 + $0x38] sm:$0xff] %v449
      %466 = vst [vmem:[%s172 + $0x40] sm:$0xff] %v450
      %467 = vst [vmem:[%s172 + $0x48] sm:$0xff] %v451
      %468 = vst [vmem:[%s172 + $0x50] sm:$0xff] %v452
      %469 = vst [vmem:[%s172 + $0x58] sm:$0xff] %v453
      %470 = vst [vmem:[%s172 + $0x60] sm:$0xff] %v454
      %471 = vst [vmem:[%s172 + $0x68] sm:$0xff] %v455
      %472 = vst [vmem:[%s172 + $0x70] sm:$0xff] %v456
      %473 = vst [vmem:[%s172 + $0x78] sm:$0xff] %v457
      %s474 = smul.u32 16, %s14
      %p475 = scmp.lt.s32.totalorder %s474, 63
      %s476 = scalar_select %p475, %s474, 63
      %s477 = smul.addr %s476, 8
      %s478 = scalar_lea.vmem %s3, %s477
      // Predicated region
      $region33: #{_lambda_.6} parent=31 // pred_check
        %p479 = pneg %p100
      $region34: #{_lambda_.6} parent=31 // pred_check_branch
        %481 = sbr.rel (%p479) target = $region36
      $region35: #{_lambda_.6} parent=31 // pred_region
        %s482 = smul.u32 16, %s14
      $region36: #{_lambda_.6} parent=31 // pred_fallthru
        _
    $region32: #{_lambda_.6} parent=5 // pred_fallthru
      _
    %p483 = scmp.le.s32.totalorder 2, %s9
    // Predicated region
    $region37: #{_lambda_.6} parent=5 // pred_check
      %p484 = pneg %p483
    $region38: #{_lambda_.6} parent=5 // pred_check_branch
      %486 = sbr.rel (%p484) target = $region40
    $region39: #{_lambda_.6} parent=5 // pred_region
      %s487 = ssub.s32 %s9, 2
      // Predicated region
      $region41: #{_lambda_.6} parent=39 // pred_check
        %p488 = pneg %p106
      $region42: #{_lambda_.6} parent=39 // pred_check_branch
        %490 = sbr.rel (%p488) target = $region44
      $region43: #{_lambda_.6} parent=39 // pred_region
        %s491 = smul.u32 16, %s15
        %p492 = scmp.lt.s32.totalorder %s491, 63
        %s493 = scalar_select %p492, %s491, 63
        %s494 = smul.addr %s493, 8
        %s495 = scalar_lea.vmem %s3, %s494
      $region44: #{_lambda_.6} parent=39 // pred_fallthru
        _
    $region40: #{_lambda_.6} parent=5 // pred_fallthru
      _
  $region6: #{_lambda_.6} parent=0 // loop_footer
    %s13 = sadd.s32 1, %s9
  $region7: #{_lambda_.6} parent=0 // loop_footer_branch
    %8 = sbr.rel target = $region3
  $region8: #{_lambda_.6} parent=0 // loop_exit
    _

// kernel: _lambda_.7
$region0: #{_lambda_.7}
  #allocation0 [shape = 'u32[]', space=smem, size = 0x4, offset = 0x4, fixed_abs, tag = 'smem constant byte address 0x4 - core index']
  #allocation1 [shape = 'u32[144,128]{1,0:T(1,128)}', space=vmem, size = 0x12000, scoped, tag = 'internal scratch']
  %s0 = inlined_call_operand.vmem [shape: bf16[112,256], index: 0, kind: input, shape index: {}]
  %s1 = inlined_call_operand.vmem [shape: bf16[256,128], index: 1, kind: input, shape index: {}]
  %s2 = inlined_call_operand.vmem [shape: f32[2,128], index: 2, kind: input, shape index: {}]
  %s3 = inlined_call_operand.vmem [shape: f32[112,128], index: 3, kind: output, shape index: {}]
  %s4 = sld [smem:[#allocation0]]
  $region22: #{_lambda_.7} parent=0
    _
  %s6 = ssub.s32 1, %s4
  %s7 = scalar_select 0, %s6, %s4
  // Predicated region
  $region2: #{_lambda_.7} parent=0 // pred_check
    _
  $region3: #{_lambda_.7} parent=0 // pred_check_branch
    %9 = sbr.rel (0) target = $region5
  $region4: #{_lambda_.7} parent=0 // pred_region
    _
  $region5: #{_lambda_.7} parent=0 // pred_fallthru
    _
  // Predicated region
  $region6: #{_lambda_.7} parent=0 // pred_check
    _
  $region7: #{_lambda_.7} parent=0 // pred_check_branch
    %11 = sbr.rel (0) target = $region9
  $region8: #{_lambda_.7} parent=0 // pred_region
    _
  $region9: #{_lambda_.7} parent=0 // pred_fallthru
    _
  // Predicated region
  $region10: #{_lambda_.7} parent=0 // pred_check
    _
  $region11: #{_lambda_.7} parent=0 // pred_check_branch
    %13 = sbr.rel (0) target = $region13
  $region12: #{_lambda_.7} parent=0 // pred_region
    _
  $region13: #{_lambda_.7} parent=0 // pred_fallthru
    _
  %v15 = vld [vmem:[%s0] sm:$0xff]
  %v16 = vld [vmem:[%s0 + $0x8] sm:$0xff]
  %v17 = vld [vmem:[%s0 + $0x10] sm:$0xff]
  %v18 = vld [vmem:[%s0 + $0x18] sm:$0xff]
  %v19 = vld [vmem:[%s0 + $0x20] sm:$0xff]
  %v20 = vld [vmem:[%s0 + $0x28] sm:$0xff]
  %v21 = vld [vmem:[%s0 + $0x30] sm:$0xff]
  %v22 = vld [vmem:[%s0 + $0x38] sm:$0xff]
  %v23 = vld [vmem:[%s0 + $0x40] sm:$0xff]
  %v24 = vld [vmem:[%s0 + $0x48] sm:$0xff]
  %v25 = vld [vmem:[%s0 + $0x50] sm:$0xff]
  %v26 = vld [vmem:[%s0 + $0x58] sm:$0xff]
  %v27 = vld [vmem:[%s0 + $0x60] sm:$0xff]
  %v28 = vld [vmem:[%s0 + $0x68] sm:$0xff]
  %v29 = vld [vmem:[%s1] sm:$0xf]
  %v30 = vld [vmem:[%s1 + $0x4] sm:$0xf]
  %v31 = vld [vmem:[%s1 + $0x8] sm:$0xf]
  %v32 = vld [vmem:[%s1 + $0xc] sm:$0xf]
  %v33 = vld [vmem:[%s1 + $0x10] sm:$0xf]
  %v34 = vld [vmem:[%s1 + $0x14] sm:$0xf]
  %v35 = vld [vmem:[%s1 + $0x18] sm:$0xf]
  %v36 = vld [vmem:[%s1 + $0x1c] sm:$0xf]
  %v37 = vld [vmem:[%s1 + $0x20] sm:$0xf]
  %v38 = vld [vmem:[%s1 + $0x24] sm:$0xf]
  %v39 = vld [vmem:[%s1 + $0x28] sm:$0xf]
  %v40 = vld [vmem:[%s1 + $0x2c] sm:$0xf]
  %v41 = vld [vmem:[%s1 + $0x30] sm:$0xf]
  %v42 = vld [vmem:[%s1 + $0x34] sm:$0xf]
  %v43 = vld [vmem:[%s1 + $0x38] sm:$0xf]
  %v44 = vld [vmem:[%s1 + $0x3c] sm:$0xf]
  %v45 = vld [vmem:[%s1 + $0x40] sm:$0xf]
  %v46 = vld [vmem:[%s1 + $0x44] sm:$0xf]
  %v47 = vld [vmem:[%s1 + $0x48] sm:$0xf]
  %v48 = vld [vmem:[%s1 + $0x4c] sm:$0xf]
  %v49 = vld [vmem:[%s1 + $0x50] sm:$0xf]
  %v50 = vld [vmem:[%s1 + $0x54] sm:$0xf]
  %v51 = vld [vmem:[%s1 + $0x58] sm:$0xf]
  %v52 = vld [vmem:[%s1 + $0x5c] sm:$0xf]
  %v53 = vld [vmem:[%s1 + $0x60] sm:$0xf]
  %v54 = vld [vmem:[%s1 + $0x64] sm:$0xf]
  %v55 = vld [vmem:[%s1 + $0x68] sm:$0xf]
  %v56 = vld [vmem:[%s1 + $0x6c] sm:$0xf]
  %v57 = vld [vmem:[%s1 + $0x70] sm:$0xf]
  %v58 = vld [vmem:[%s1 + $0x74] sm:$0xf]
  %v59 = vld [vmem:[%s1 + $0x78] sm:$0xf]
  %v60 = vld [vmem:[%s1 + $0x7c] sm:$0xf]
  %v75 = vunpack.c.l.b16 %v15
  %v76 = vunpack.c.h.b16 %v15
  %v77 = vunpack.c.l.b16 %v16
  %v78 = vunpack.c.h.b16 %v16
  %v79 = vunpack.c.l.b16 %v17
  %v80 = vunpack.c.h.b16 %v17
  %v81 = vunpack.c.l.b16 %v18
  %v82 = vunpack.c.h.b16 %v18
  %v83 = vunpack.c.l.b16 %v19
  %v84 = vunpack.c.h.b16 %v19
  %v85 = vunpack.c.l.b16 %v20
  %v86 = vunpack.c.h.b16 %v20
  %v87 = vunpack.c.l.b16 %v21
  %v88 = vunpack.c.h.b16 %v21
  %v89 = vunpack.c.l.b16 %v22
  %v90 = vunpack.c.h.b16 %v22
  %v91 = vunpack.c.l.b16 %v23
  %v92 = vunpack.c.h.b16 %v23
  %v93 = vunpack.c.l.b16 %v24
  %v94 = vunpack.c.h.b16 %v24
  %v95 = vunpack.c.l.b16 %v25
  %v96 = vunpack.c.h.b16 %v25
  %v97 = vunpack.c.l.b16 %v26
  %v98 = vunpack.c.h.b16 %v26
  %v99 = vunpack.c.l.b16 %v27
  %v100 = vunpack.c.h.b16 %v27
  %v101 = vunpack.c.l.b16 %v28
  %v102 = vunpack.c.h.b16 %v28
  %v103 = vpack.c.b16 %v77, %v75
  %v104 = vpack.c.b16 %v78, %v76
  %v105 = vpack.c.b16 %v81, %v79
  %v106 = vpack.c.b16 %v82, %v80
  %v107 = vpack.c.b16 %v85, %v83
  %v108 = vpack.c.b16 %v86, %v84
  %v109 = vpack.c.b16 %v89, %v87
  %v110 = vpack.c.b16 %v90, %v88
  %v111 = vpack.c.b16 %v93, %v91
  %v112 = vpack.c.b16 %v94, %v92
  %v113 = vpack.c.b16 %v97, %v95
  %v114 = vpack.c.b16 %v98, %v96
  %v115 = vpack.c.b16 %v101, %v99
  %v116 = vpack.c.b16 %v102, %v100
  %v163 = vunpack.c.l.b16 %v29
  %v164 = vunpack.c.l.b16 %v30
  %v165 = vunpack.c.l.b16 %v31
  %v166 = vunpack.c.l.b16 %v32
  %v167 = vunpack.c.l.b16 %v33
  %v168 = vunpack.c.l.b16 %v34
  %v169 = vunpack.c.l.b16 %v35
  %v170 = vunpack.c.l.b16 %v36
  %v171 = vunpack.c.l.b16 %v37
  %v172 = vunpack.c.l.b16 %v38
  %v173 = vunpack.c.l.b16 %v39
  %v174 = vunpack.c.l.b16 %v40
  %v175 = vunpack.c.l.b16 %v41
  %v176 = vunpack.c.l.b16 %v42
  %v177 = vunpack.c.l.b16 %v43
  %v178 = vunpack.c.l.b16 %v44
  %v179 = vunpack.c.l.b16 %v45
  %v180 = vunpack.c.l.b16 %v46
  %v181 = vunpack.c.l.b16 %v47
  %v182 = vunpack.c.l.b16 %v48
  %v183 = vunpack.c.l.b16 %v49
  %v184 = vunpack.c.l.b16 %v50
  %v185 = vunpack.c.l.b16 %v51
  %v186 = vunpack.c.l.b16 %v52
  %v187 = vunpack.c.l.b16 %v53
  %v188 = vunpack.c.l.b16 %v54
  %v189 = vunpack.c.l.b16 %v55
  %v190 = vunpack.c.l.b16 %v56
  %v191 = vunpack.c.l.b16 %v57
  %v192 = vunpack.c.l.b16 %v58
  %v193 = vunpack.c.l.b16 %v59
  %v194 = vunpack.c.l.b16 %v60
  %v195 = vpack.c.b16 %v164, %v163
  %v196 = vpack.c.b16 %v166, %v165
  %v197 = vpack.c.b16 %v168, %v167
  %v198 = vpack.c.b16 %v170, %v169
  %v199 = vpack.c.b16 %v172, %v171
  %v200 = vpack.c.b16 %v174, %v173
  %v201 = vpack.c.b16 %v176, %v175
  %v202 = vpack.c.b16 %v178, %v177
  %v203 = vpack.c.b16 %v180, %v179
  %v204 = vpack.c.b16 %v182, %v181
  %v205 = vpack.c.b16 %v184, %v183
  %v206 = vpack.c.b16 %v186, %v185
  %v207 = vpack.c.b16 %v188, %v187
  %v208 = vpack.c.b16 %v190, %v189
  %v209 = vpack.c.b16 %v192, %v191
  %v210 = vpack.c.b16 %v194, %v193
  %227 = vmatprep.subr.bf16.mxu0 0
  %228 = vmatpush1.bf16.msra.mxu0 %v195
  %229 = vmatprep.subr.bf16.mxu0 0
  %230 = vmatpush1.bf16.msra.mxu0 %v196
  %231 = vmatprep.subr.bf16.mxu0 0
  %232 = vmatpush1.bf16.msra.mxu0 %v197
  %233 = vmatprep.subr.bf16.mxu0 0
  %234 = vmatpush1.bf16.msra.mxu0 %v198
  %235 = vmatprep.subr.bf16.mxu0 0
  %236 = vmatpush1.bf16.msra.mxu0 %v199
  %237 = vmatprep.subr.bf16.mxu0 0
  %238 = vmatpush1.bf16.msra.mxu0 %v200
  %239 = vmatprep.subr.bf16.mxu0 0
  %240 = vmatpush1.bf16.msra.mxu0 %v201
  %241 = vmatprep.subr.bf16.mxu0 0
  %242 = vmatpush1.bf16.msra.mxu0 %v202
  %243 = vmatprep.subr.bf16.mxu0 0
  %244 = vmatpush1.bf16.msra.mxu0 %v203
  %245 = vmatprep.subr.bf16.mxu0 0
  %246 = vmatpush1.bf16.msra.mxu0 %v204
  %247 = vmatprep.subr.bf16.mxu0 0
  %248 = vmatpush1.bf16.msra.mxu0 %v205
  %249 = vmatprep.subr.bf16.mxu0 0
  %250 = vmatpush1.bf16.msra.mxu0 %v206
  %251 = vmatprep.subr.bf16.mxu0 0
  %252 = vmatpush1.bf16.msra.mxu0 %v207
  %253 = vmatprep.subr.bf16.mxu0 0
  %254 = vmatpush1.bf16.msra.mxu0 %v208
  %255 = vmatprep.subr.bf16.mxu0 0
  %256 = vmatpush1.bf16.msra.mxu0 %v209
  %257 = vmatprep.subr.bf16.mxu0 0
  %258 = vmatpush1.bf16.msra.mxu0 %v210
  %259 = vmatprep.mubr.bf16.mxu0 %v104
  %260 = vmatmul.mubr.bf16.gmra.mrb[0].mxu0 %v103
  %v261 = vpop.f32.mrb[0].mxu0
  %v262 = vadd.f32 0.0, %v261
  %v263 = vpop.f32.mrb[0].mxu0
  %v264 = vpop.f32.mrb[0].mxu0
  %v265 = vadd.f32 0.0, %v264
  %v266 = vpop.f32.mrb[0].mxu0
  %267 = vmatprep.mubr.bf16.mxu0 %v106
  %268 = vmatmul.mubr.bf16.gmra.mrb[0].mxu0 %v105
  %v269 = vpop.f32.mrb[0].mxu0
  %v270 = vadd.f32 0.0, %v269
  %v271 = vpop.f32.mrb[0].mxu0
  %v272 = vpop.f32.mrb[0].mxu0
  %v273 = vadd.f32 0.0, %v272
  %v274 = vpop.f32.mrb[0].mxu0
  %275 = vmatprep.mubr.bf16.mxu0 %v108
  %276 = vmatmul.mubr.bf16.gmra.mrb[0].mxu0 %v107
  %v277 = vpop.f32.mrb[0].mxu0
  %v278 = vadd.f32 0.0, %v277
  %v279 = vpop.f32.mrb[0].mxu0
  %v280 = vpop.f32.mrb[0].mxu0
  %v281 = vadd.f32 0.0, %v280
  %v282 = vpop.f32.mrb[0].mxu0
  %283 = vmatprep.mubr.bf16.mxu0 %v110
  %284 = vmatmul.mubr.bf16.gmra.mrb[0].mxu0 %v109
  %v285 = vpop.f32.mrb[0].mxu0
  %v286 = vadd.f32 0.0, %v285
  %v287 = vpop.f32.mrb[0].mxu0
  %v288 = vpop.f32.mrb[0].mxu0
  %v289 = vadd.f32 0.0, %v288
  %v290 = vpop.f32.mrb[0].mxu0
  %291 = vmatprep.mubr.bf16.mxu0 %v112
  %292 = vmatmul.mubr.bf16.gmra.mrb[0].mxu0 %v111
  %v293 = vpop.f32.mrb[0].mxu0
  %v294 = vadd.f32 0.0, %v293
  %v295 = vpop.f32.mrb[0].mxu0
  %v296 = vpop.f32.mrb[0].mxu0
  %v297 = vadd.f32 0.0, %v296
  %v298 = vpop.f32.mrb[0].mxu0
  %299 = vmatprep.mubr.bf16.mxu0 %v114
  %300 = vmatmul.mubr.bf16.gmra.mrb[0].mxu0 %v113
  %v301 = vpop.f32.mrb[0].mxu0
  %v302 = vadd.f32 0.0, %v301
  %v303 = vpop.f32.mrb[0].mxu0
  %v304 = vpop.f32.mrb[0].mxu0
  %v305 = vadd.f32 0.0, %v304
  %v306 = vpop.f32.mrb[0].mxu0
  %307 = vmatprep.mubr.bf16.mxu0 %v116
  %308 = vmatmul.mubr.bf16.gmra.mrb[0].mxu0 %v115
  %v309 = vpop.f32.mrb[0].mxu0
  %v310 = vadd.f32 0.0, %v309
  %v311 = vpop.f32.mrb[0].mxu0
  %v312 = vpop.f32.mrb[0].mxu0
  %v313 = vadd.f32 0.0, %v312
  %v314 = vpop.f32.mrb[0].mxu0
  %315 = vdwg.mxu0
  %v316 = vld [vmem:[%s2] sm:$0x1]
  %v317 = vlaneseq
  %v318 = vshrl.u32 %v317, 7
  %v319 = vsub.s32 0, %v318
  %v320 = vrot.slane %v316, %v319
  %v321 = vmul.f32 %v262, %v320
  %v322 = vmul.f32 %v265, %v320
  %v323 = vmul.f32 %v270, %v320
  %v324 = vmul.f32 %v273, %v320
  %v325 = vmul.f32 %v278, %v320
  %v326 = vmul.f32 %v281, %v320
  %v327 = vmul.f32 %v286, %v320
  %v328 = vmul.f32 %v289, %v320
  %v329 = vmul.f32 %v294, %v320
  %v330 = vmul.f32 %v297, %v320
  %v331 = vmul.f32 %v302, %v320
  %v332 = vmul.f32 %v305, %v320
  %v333 = vmul.f32 %v310, %v320
  %v334 = vmul.f32 %v313, %v320
  %v335 = vld [vmem:[%s2 + $0x1] sm:$0x1]
  %v336 = vlaneseq
  %v337 = vshrl.u32 %v336, 7
  %v338 = vsub.s32 0, %v337
  %v339 = vrot.slane %v335, %v338
  %v340 = vadd.f32 %v321, %v339
  %v341 = vadd.f32 %v322, %v339
  %v342 = vadd.f32 %v323, %v339
  %v343 = vadd.f32 %v324, %v339
  %v344 = vadd.f32 %v325, %v339
  %v345 = vadd.f32 %v326, %v339
  %v346 = vadd.f32 %v327, %v339
  %v347 = vadd.f32 %v328, %v339
  %v348 = vadd.f32 %v329, %v339
  %v349 = vadd.f32 %v330, %v339
  %v350 = vadd.f32 %v331, %v339
  %v351 = vadd.f32 %v332, %v339
  %v352 = vadd.f32 %v333, %v339
  %v353 = vadd.f32 %v334, %v339
  %v354 = vmax.f32 %v340, 0.0
  %v355 = vmax.f32 %v341, 0.0
  %v356 = vmax.f32 %v342, 0.0
  %v357 = vmax.f32 %v343, 0.0
  %v358 = vmax.f32 %v344, 0.0
  %v359 = vmax.f32 %v345, 0.0
  %v360 = vmax.f32 %v346, 0.0
  %v361 = vmax.f32 %v347, 0.0
  %v362 = vmax.f32 %v348, 0.0
  %v363 = vmax.f32 %v349, 0.0
  %v364 = vmax.f32 %v350, 0.0
  %v365 = vmax.f32 %v351, 0.0
  %v366 = vmax.f32 %v352, 0.0
  %v367 = vmax.f32 %v353, 0.0
  %368 = vst [vmem:[%s3] sm:$0xff] %v354
  %369 = vst [vmem:[%s3 + $0x8] sm:$0xff] %v355
  %370 = vst [vmem:[%s3 + $0x10] sm:$0xff] %v356
  %371 = vst [vmem:[%s3 + $0x18] sm:$0xff] %v357
  %372 = vst [vmem:[%s3 + $0x20] sm:$0xff] %v358
  %373 = vst [vmem:[%s3 + $0x28] sm:$0xff] %v359
  %374 = vst [vmem:[%s3 + $0x30] sm:$0xff] %v360
  %375 = vst [vmem:[%s3 + $0x38] sm:$0xff] %v361
  %376 = vst [vmem:[%s3 + $0x40] sm:$0xff] %v362
  %377 = vst [vmem:[%s3 + $0x48] sm:$0xff] %v363
  %378 = vst [vmem:[%s3 + $0x50] sm:$0xff] %v364
  %379 = vst [vmem:[%s3 + $0x58] sm:$0xff] %v365
  %380 = vst [vmem:[%s3 + $0x60] sm:$0xff] %v366
  %381 = vst [vmem:[%s3 + $0x68] sm:$0xff] %v367
  // Predicated region
  $region14: #{_lambda_.7} parent=0 // pred_check
    _
  $region15: #{_lambda_.7} parent=0 // pred_check_branch
    %383 = sbr.rel (0) target = $region17
  $region16: #{_lambda_.7} parent=0 // pred_region
    _
  $region17: #{_lambda_.7} parent=0 // pred_fallthru
    _
  // Predicated region
  $region18: #{_lambda_.7} parent=0 // pred_check
    _
  $region19: #{_lambda_.7} parent=0 // pred_check_branch
    %385 = sbr.rel (0) target = $region21
  $region20: #{_lambda_.7} parent=0 // pred_region
    _
  $region21: #{_lambda_.7} parent=0 // pred_fallthru
    _

// kernel: _lambda_.8
$region0: #{_lambda_.8}
  #allocation0 [shape = 'u32[]', space=smem, size = 0x4, offset = 0x4, fixed_abs, tag = 'smem constant byte address 0x4 - core index']
  #allocation1 [shape = 'u32[144,128]{1,0:T(1,128)}', space=vmem, size = 0x12000, scoped, tag = 'internal scratch']
  %s0 = inlined_call_operand.vmem [shape: bf16[32,384], index: 0, kind: input, shape index: {}]
  %s1 = inlined_call_operand.vmem [shape: bf16[384,128], index: 1, kind: input, shape index: {}]
  %s2 = inlined_call_operand.vmem [shape: f32[2,128], index: 2, kind: input, shape index: {}]
  %s3 = inlined_call_operand.vmem [shape: f32[32,128], index: 3, kind: output, shape index: {}]
  %s4 = sld [smem:[#allocation0]]
  $region22: #{_lambda_.8} parent=0
    _
  %s6 = ssub.s32 1, %s4
  %s7 = scalar_select 0, %s6, %s4
  // Predicated region
  $region2: #{_lambda_.8} parent=0 // pred_check
    _
  $region3: #{_lambda_.8} parent=0 // pred_check_branch
    %9 = sbr.rel (0) target = $region5
  $region4: #{_lambda_.8} parent=0 // pred_region
    _
  $region5: #{_lambda_.8} parent=0 // pred_fallthru
    _
  // Predicated region
  $region6: #{_lambda_.8} parent=0 // pred_check
    _
  $region7: #{_lambda_.8} parent=0 // pred_check_branch
    %11 = sbr.rel (0) target = $region9
  $region8: #{_lambda_.8} parent=0 // pred_region
    _
  $region9: #{_lambda_.8} parent=0 // pred_fallthru
    _
  // Predicated region
  $region10: #{_lambda_.8} parent=0 // pred_check
    _
  $region11: #{_lambda_.8} parent=0 // pred_check_branch
    %13 = sbr.rel (0) target = $region13
  $region12: #{_lambda_.8} parent=0 // pred_region
    _
  $region13: #{_lambda_.8} parent=0 // pred_fallthru
    _
  %v15 = vld [vmem:[%s0] sm:$0xff]
  %v16 = vld [vmem:[%s0 + $0x8] sm:$0xf]
  %v17 = vld [vmem:[%s0 + $0xc] sm:$0xff]
  %v18 = vld [vmem:[%s0 + $0x14] sm:$0xf]
  %v19 = vld [vmem:[%s0 + $0x18] sm:$0xff]
  %v20 = vld [vmem:[%s0 + $0x20] sm:$0xf]
  %v21 = vld [vmem:[%s0 + $0x24] sm:$0xff]
  %v22 = vld [vmem:[%s0 + $0x2c] sm:$0xf]
  %v23 = vld [vmem:[%s1] sm:$0xf]
  %v24 = vld [vmem:[%s1 + $0x4] sm:$0xf]
  %v25 = vld [vmem:[%s1 + $0x8] sm:$0xf]
  %v26 = vld [vmem:[%s1 + $0xc] sm:$0xf]
  %v27 = vld [vmem:[%s1 + $0x10] sm:$0xf]
  %v28 = vld [vmem:[%s1 + $0x14] sm:$0xf]
  %v29 = vld [vmem:[%s1 + $0x18] sm:$0xf]
  %v30 = vld [vmem:[%s1 + $0x1c] sm:$0xf]
  %v31 = vld [vmem:[%s1 + $0x20] sm:$0xf]
  %v32 = vld [vmem:[%s1 + $0x24] sm:$0xf]
  %v33 = vld [vmem:[%s1 + $0x28] sm:$0xf]
  %v34 = vld [vmem:[%s1 + $0x2c] sm:$0xf]
  %v35 = vld [vmem:[%s1 + $0x30] sm:$0xf]
  %v36 = vld [vmem:[%s1 + $0x34] sm:$0xf]
  %v37 = vld [vmem:[%s1 + $0x38] sm:$0xf]
  %v38 = vld [vmem:[%s1 + $0x3c] sm:$0xf]
  %v39 = vld [vmem:[%s1 + $0x40] sm:$0xf]
  %v40 = vld [vmem:[%s1 + $0x44] sm:$0xf]
  %v41 = vld [vmem:[%s1 + $0x48] sm:$0xf]
  %v42 = vld [vmem:[%s1 + $0x4c] sm:$0xf]
  %v43 = vld [vmem:[%s1 + $0x50] sm:$0xf]
  %v44 = vld [vmem:[%s1 + $0x54] sm:$0xf]
  %v45 = vld [vmem:[%s1 + $0x58] sm:$0xf]
  %v46 = vld [vmem:[%s1 + $0x5c] sm:$0xf]
  %v47 = vld [vmem:[%s1 + $0x60] sm:$0xf]
  %v48 = vld [vmem:[%s1 + $0x64] sm:$0xf]
  %v49 = vld [vmem:[%s1 + $0x68] sm:$0xf]
  %v50 = vld [vmem:[%s1 + $0x6c] sm:$0xf]
  %v51 = vld [vmem:[%s1 + $0x70] sm:$0xf]
  %v52 = vld [vmem:[%s1 + $0x74] sm:$0xf]
  %v53 = vld [vmem:[%s1 + $0x78] sm:$0xf]
  %v54 = vld [vmem:[%s1 + $0x7c] sm:$0xf]
  %v55 = vld [vmem:[%s1 + $0x80] sm:$0xf]
  %v56 = vld [vmem:[%s1 + $0x84] sm:$0xf]
  %v57 = vld [vmem:[%s1 + $0x88] sm:$0xf]
  %v58 = vld [vmem:[%s1 + $0x8c] sm:$0xf]
  %v59 = vld [vmem:[%s1 + $0x90] sm:$0xf]
  %v60 = vld [vmem:[%s1 + $0x94] sm:$0xf]
  %v61 = vld [vmem:[%s1 + $0x98] sm:$0xf]
  %v62 = vld [vmem:[%s1 + $0x9c] sm:$0xf]
  %v63 = vld [vmem:[%s1 + $0xa0] sm:$0xf]
  %v64 = vld [vmem:[%s1 + $0xa4] sm:$0xf]
  %v65 = vld [vmem:[%s1 + $0xa8] sm:$0xf]
  %v66 = vld [vmem:[%s1 + $0xac] sm:$0xf]
  %v67 = vld [vmem:[%s1 + $0xb0] sm:$0xf]
  %v68 = vld [vmem:[%s1 + $0xb4] sm:$0xf]
  %v69 = vld [vmem:[%s1 + $0xb8] sm:$0xf]
  %v70 = vld [vmem:[%s1 + $0xbc] sm:$0xf]
  %v79 = vunpack.c.l.b16 %v15
  %v80 = vunpack.c.h.b16 %v15
  %v81 = vunpack.c.l.b16 %v16
  %v82 = vunpack.c.l.b16 %v17
  %v83 = vunpack.c.h.b16 %v17
  %v84 = vunpack.c.l.b16 %v18
  %v85 = vunpack.c.l.b16 %v19
  %v86 = vunpack.c.h.b16 %v19
  %v87 = vunpack.c.l.b16 %v20
  %v88 = vunpack.c.l.b16 %v21
  %v89 = vunpack.c.h.b16 %v21
  %v90 = vunpack.c.l.b16 %v22
  %v91 = vpack.c.b16 %v82, %v79
  %v92 = vpack.c.b16 %v83, %v80
  %v93 = vpack.c.b16 %v84, %v81
  %v94 = vpack.c.b16 %v88, %v85
  %v95 = vpack.c.b16 %v89, %v86
  %v96 = vpack.c.b16 %v90, %v87
  %v151 = vunpack.c.l.b16 %v23
  %v152 = vunpack.c.l.b16 %v24
  %v153 = vunpack.c.l.b16 %v25
  %v154 = vunpack.c.l.b16 %v26
  %v155 = vunpack.c.l.b16 %v27
  %v156 = vunpack.c.l.b16 %v28
  %v157 = vunpack.c.l.b16 %v29
  %v158 = vunpack.c.l.b16 %v30
  %v159 = vunpack.c.l.b16 %v31
  %v160 = vunpack.c.l.b16 %v32
  %v161 = vunpack.c.l.b16 %v33
  %v162 = vunpack.c.l.b16 %v34
  %v163 = vunpack.c.l.b16 %v35
  %v164 = vunpack.c.l.b16 %v36
  %v165 = vunpack.c.l.b16 %v37
  %v166 = vunpack.c.l.b16 %v38
  %v167 = vunpack.c.l.b16 %v39
  %v168 = vunpack.c.l.b16 %v40
  %v169 = vunpack.c.l.b16 %v41
  %v170 = vunpack.c.l.b16 %v42
  %v171 = vunpack.c.l.b16 %v43
  %v172 = vunpack.c.l.b16 %v44
  %v173 = vunpack.c.l.b16 %v45
  %v174 = vunpack.c.l.b16 %v46
  %v175 = vunpack.c.l.b16 %v47
  %v176 = vunpack.c.l.b16 %v48
  %v177 = vunpack.c.l.b16 %v49
  %v178 = vunpack.c.l.b16 %v50
  %v179 = vunpack.c.l.b16 %v51
  %v180 = vunpack.c.l.b16 %v52
  %v181 = vunpack.c.l.b16 %v53
  %v182 = vunpack.c.l.b16 %v54
  %v183 = vunpack.c.l.b16 %v55
  %v184 = vunpack.c.l.b16 %v56
  %v185 = vunpack.c.l.b16 %v57
  %v186 = vunpack.c.l.b16 %v58
  %v187 = vunpack.c.l.b16 %v59
  %v188 = vunpack.c.l.b16 %v60
  %v189 = vunpack.c.l.b16 %v61
  %v190 = vunpack.c.l.b16 %v62
  %v191 = vunpack.c.l.b16 %v63
  %v192 = vunpack.c.l.b16 %v64
  %v193 = vunpack.c.l.b16 %v65
  %v194 = vunpack.c.l.b16 %v66
  %v195 = vunpack.c.l.b16 %v67
  %v196 = vunpack.c.l.b16 %v68
  %v197 = vunpack.c.l.b16 %v69
  %v198 = vunpack.c.l.b16 %v70
  %v199 = vpack.c.b16 %v152, %v151
  %v200 = vpack.c.b16 %v154, %v153
  %v201 = vpack.c.b16 %v156, %v155
  %v202 = vpack.c.b16 %v158, %v157
  %v203 = vpack.c.b16 %v160, %v159
  %v204 = vpack.c.b16 %v162, %v161
  %v205 = vpack.c.b16 %v164, %v163
  %v206 = vpack.c.b16 %v166, %v165
  %v207 = vpack.c.b16 %v168, %v167
  %v208 = vpack.c.b16 %v170, %v169
  %v209 = vpack.c.b16 %v172, %v171
  %v210 = vpack.c.b16 %v174, %v173
  %v211 = vpack.c.b16 %v176, %v175
  %v212 = vpack.c.b16 %v178, %v177
  %v213 = vpack.c.b16 %v180, %v179
  %v214 = vpack.c.b16 %v182, %v181
  %v215 = vpack.c.b16 %v184, %v183
  %v216 = vpack.c.b16 %v186, %v185
  %v217 = vpack.c.b16 %v188, %v187
  %v218 = vpack.c.b16 %v190, %v189
  %v219 = vpack.c.b16 %v192, %v191
  %v220 = vpack.c.b16 %v194, %v193
  %v221 = vpack.c.b16 %v196, %v195
  %v222 = vpack.c.b16 %v198, %v197
  %247 = vmatprep.subr.bf16.mxu0 0
  %248 = vmatpush1.bf16.msra.mxu0 %v199
  %249 = vmatprep.subr.bf16.mxu0 0
  %250 = vmatpush1.bf16.msra.mxu0 %v200
  %251 = vmatprep.subr.bf16.mxu0 0
  %252 = vmatpush1.bf16.msra.mxu0 %v201
  %253 = vmatprep.subr.bf16.mxu0 0
  %254 = vmatpush1.bf16.msra.mxu0 %v202
  %255 = vmatprep.subr.bf16.mxu0 0
  %256 = vmatpush1.bf16.msra.mxu0 %v203
  %257 = vmatprep.subr.bf16.mxu0 0
  %258 = vmatpush1.bf16.msra.mxu0 %v204
  %259 = vmatprep.subr.bf16.mxu0 0
  %260 = vmatpush1.bf16.msra.mxu0 %v205
  %261 = vmatprep.subr.bf16.mxu0 0
  %262 = vmatpush1.bf16.msra.mxu0 %v206
  %263 = vmatprep.subr.bf16.mxu0 0
  %264 = vmatpush1.bf16.msra.mxu0 %v207
  %265 = vmatprep.subr.bf16.mxu0 0
  %266 = vmatpush1.bf16.msra.mxu0 %v208
  %267 = vmatprep.subr.bf16.mxu0 0
  %268 = vmatpush1.bf16.msra.mxu0 %v209
  %269 = vmatprep.subr.bf16.mxu0 0
  %270 = vmatpush1.bf16.msra.mxu0 %v210
  %271 = vmatprep.subr.bf16.mxu0 0
  %272 = vmatpush1.bf16.msra.mxu0 %v211
  %273 = vmatprep.subr.bf16.mxu0 0
  %274 = vmatpush1.bf16.msra.mxu0 %v212
  %275 = vmatprep.subr.bf16.mxu0 0
  %276 = vmatpush1.bf16.msra.mxu0 %v213
  %277 = vmatprep.subr.bf16.mxu0 0
  %278 = vmatpush1.bf16.msra.mxu0 %v214
  %279 = vmatprep.mubr.bf16.mxu0 %v92
  %280 = vmatmul.mubr.bf16.gmra.mrb[0].mxu0 %v91
  %v281 = vpop.f32.mrb[0].mxu0
  %v282 = vadd.f32 0.0, %v281
  %v283 = vpop.f32.mrb[0].mxu0
  %v284 = vpop.f32.mrb[0].mxu0
  %v285 = vadd.f32 0.0, %v284
  %v286 = vpop.f32.mrb[0].mxu0
  %287 = vmatprep.mubr.bf16.mxu0 %v95
  %288 = vmatmul.mubr.bf16.gmra.mrb[0].mxu0 %v94
  %v289 = vpop.f32.mrb[0].mxu0
  %v290 = vadd.f32 0.0, %v289
  %v291 = vpop.f32.mrb[0].mxu0
  %v292 = vpop.f32.mrb[0].mxu0
  %v293 = vadd.f32 0.0, %v292
  %v294 = vpop.f32.mrb[0].mxu0
  %295 = vdwg.mxu0
  %296 = vmatprep.subr.bf16.mxu0 0
  %297 = vmatpush1.bf16.msra.mxu0 %v215
  %298 = vmatprep.subr.bf16.mxu0 0
  %299 = vmatpush1.bf16.msra.mxu0 %v216
  %300 = vmatprep.subr.bf16.mxu0 0
  %301 = vmatpush1.bf16.msra.mxu0 %v217
  %302 = vmatprep.subr.bf16.mxu0 0
  %303 = vmatpush1.bf16.msra.mxu0 %v218
  %304 = vmatprep.subr.bf16.mxu0 0
  %305 = vmatpush1.bf16.msra.mxu0 %v219
  %306 = vmatprep.subr.bf16.mxu0 0
  %307 = vmatpush1.bf16.msra.mxu0 %v220
  %308 = vmatprep.subr.bf16.mxu0 0
  %309 = vmatpush1.bf16.msra.mxu0 %v221
  %310 = vmatprep.subr.bf16.mxu0 0
  %311 = vmatpush1.bf16.msra.mxu0 %v222
  %312 = vmatprep.subr.bf16.mxu0 0
  %313 = vmatpush1.bf16.msra.mxu0 0
  %314 = vmatprep.subr.bf16.mxu0 0
  %315 = vmatpush1.bf16.msra.mxu0 0
  %316 = vmatprep.subr.bf16.mxu0 0
  %317 = vmatpush1.bf16.msra.mxu0 0
  %318 = vmatprep.subr.bf16.mxu0 0
  %319 = vmatpush1.bf16.msra.mxu0 0
  %320 = vmatprep.subr.bf16.mxu0 0
  %321 = vmatpush1.bf16.msra.mxu0 0
  %322 = vmatprep.subr.bf16.mxu0 0
  %323 = vmatpush1.bf16.msra.mxu0 0
  %324 = vmatprep.subr.bf16.mxu0 0
  %325 = vmatpush1.bf16.msra.mxu0 0
  %326 = vmatprep.subr.bf16.mxu0 0
  %327 = vmatpush1.bf16.msra.mxu0 0
  %328 = vmatprep.mubr.bf16.mxu0 0
  %329 = vmatmul.mubr.bf16.gmra.mrb[0].mxu0 %v93
  %v330 = vpop.f32.mrb[0].mxu0
  %v331 = vadd.f32 %v282, %v330
  %v332 = vpop.f32.mrb[0].mxu0
  %v333 = vpop.f32.mrb[0].mxu0
  %v334 = vadd.f32 %v285, %v333
  %v335 = vpop.f32.mrb[0].mxu0
  %336 = vmatprep.mubr.bf16.mxu0 0
  %337 = vmatmul.mubr.bf16.gmra.mrb[0].mxu0 %v96
  %v338 = vpop.f32.mrb[0].mxu0
  %v339 = vadd.f32 %v290, %v338
  %v340 = vpop.f32.mrb[0].mxu0
  %v341 = vpop.f32.mrb[0].mxu0
  %v342 = vadd.f32 %v293, %v341
  %v343 = vpop.f32.mrb[0].mxu0
  %344 = vdwg.mxu0
  %v345 = vld [vmem:[%s2] sm:$0x1]
  %v346 = vlaneseq
  %v347 = vshrl.u32 %v346, 7
  %v348 = vsub.s32 0, %v347
  %v349 = vrot.slane %v345, %v348
  %v350 = vmul.f32 %v331, %v349
  %v351 = vmul.f32 %v334, %v349
  %v352 = vmul.f32 %v339, %v349
  %v353 = vmul.f32 %v342, %v349
  %v354 = vld [vmem:[%s2 + $0x1] sm:$0x1]
  %v355 = vlaneseq
  %v356 = vshrl.u32 %v355, 7
  %v357 = vsub.s32 0, %v356
  %v358 = vrot.slane %v354, %v357
  %v359 = vadd.f32 %v350, %v358
  %v360 = vadd.f32 %v351, %v358
  %v361 = vadd.f32 %v352, %v358
  %v362 = vadd.f32 %v353, %v358
  %v363 = vmax.f32 %v359, 0.0
  %v364 = vmax.f32 %v360, 0.0
  %v365 = vmax.f32 %v361, 0.0
  %v366 = vmax.f32 %v362, 0.0
  %367 = vst [vmem:[%s3] sm:$0xff] %v363
  %368 = vst [vmem:[%s3 + $0x8] sm:$0xff] %v364
  %369 = vst [vmem:[%s3 + $0x10] sm:$0xff] %v365
  %370 = vst [vmem:[%s3 + $0x18] sm:$0xff] %v366
  // Predicated region
  $region14: #{_lambda_.8} parent=0 // pred_check
    _
  $region15: #{_lambda_.8} parent=0 // pred_check_branch
    %372 = sbr.rel (0) target = $region17
  $region16: #{_lambda_.8} parent=0 // pred_region
    _
  $region17: #{_lambda_.8} parent=0 // pred_fallthru
    _
  // Predicated region
  $region18: #{_lambda_.8} parent=0 // pred_check
    _
  $region19: #{_lambda_.8} parent=0 // pred_check_branch
    %374 = sbr.rel (0) target = $region21
  $region20: #{_lambda_.8} parent=0 // pred_region
    _
  $region21: #{_lambda_.8} parent=0 // pred_fallthru
    _

// kernel: _lambda_.9
$region0: #{_lambda_.9}
  #allocation0 [shape = 'u32[]', space=smem, size = 0x4, offset = 0x4, fixed_abs, tag = 'smem constant byte address 0x4 - core index']
  #allocation1 [shape = 'u32[144,128]{1,0:T(1,128)}', space=vmem, size = 0x12000, scoped, tag = 'internal scratch']
  %s0 = inlined_call_operand.vmem [shape: bf16[16,640], index: 0, kind: input, shape index: {}]
  %s1 = inlined_call_operand.vmem [shape: bf16[640,128], index: 1, kind: input, shape index: {}]
  %s2 = inlined_call_operand.vmem [shape: f32[2,128], index: 2, kind: input, shape index: {}]
  %s3 = inlined_call_operand.vmem [shape: f32[16,128], index: 3, kind: output, shape index: {}]
  %s4 = sld [smem:[#allocation0]]
  $region22: #{_lambda_.9} parent=0
    _
  %s6 = ssub.s32 1, %s4
  %s7 = scalar_select 0, %s6, %s4
  // Predicated region
  $region2: #{_lambda_.9} parent=0 // pred_check
    _
  $region3: #{_lambda_.9} parent=0 // pred_check_branch
    %9 = sbr.rel (0) target = $region5
  $region4: #{_lambda_.9} parent=0 // pred_region
    _
  $region5: #{_lambda_.9} parent=0 // pred_fallthru
    _
  // Predicated region
  $region6: #{_lambda_.9} parent=0 // pred_check
    _
  $region7: #{_lambda_.9} parent=0 // pred_check_branch
    %11 = sbr.rel (0) target = $region9
  $region8: #{_lambda_.9} parent=0 // pred_region
    _
  $region9: #{_lambda_.9} parent=0 // pred_fallthru
    _
  // Predicated region
  $region10: #{_lambda_.9} parent=0 // pred_check
    _
  $region11: #{_lambda_.9} parent=0 // pred_check_branch
    %13 = sbr.rel (0) target = $region13
  $region12: #{_lambda_.9} parent=0 // pred_region
    _
  $region13: #{_lambda_.9} parent=0 // pred_fallthru
    _
  %v15 = vld [vmem:[%s0] sm:$0xff]
  %v16 = vld [vmem:[%s0 + $0x8] sm:$0xff]
  %v17 = vld [vmem:[%s0 + $0x10] sm:$0xf]
  %v18 = vld [vmem:[%s0 + $0x14] sm:$0xff]
  %v19 = vld [vmem:[%s0 + $0x1c] sm:$0xff]
  %v20 = vld [vmem:[%s0 + $0x24] sm:$0xf]
  %v21 = vld [vmem:[%s1] sm:$0xf]
  %v22 = vld [vmem:[%s1 + $0x4] sm:$0xf]
  %v23 = vld [vmem:[%s1 + $0x8] sm:$0xf]
  %v24 = vld [vmem:[%s1 + $0xc] sm:$0xf]
  %v25 = vld [vmem:[%s1 + $0x10] sm:$0xf]
  %v26 = vld [vmem:[%s1 + $0x14] sm:$0xf]
  %v27 = vld [vmem:[%s1 + $0x18] sm:$0xf]
  %v28 = vld [vmem:[%s1 + $0x1c] sm:$0xf]
  %v29 = vld [vmem:[%s1 + $0x20] sm:$0xf]
  %v30 = vld [vmem:[%s1 + $0x24] sm:$0xf]
  %v31 = vld [vmem:[%s1 + $0x28] sm:$0xf]
  %v32 = vld [vmem:[%s1 + $0x2c] sm:$0xf]
  %v33 = vld [vmem:[%s1 + $0x30] sm:$0xf]
  %v34 = vld [vmem:[%s1 + $0x34] sm:$0xf]
  %v35 = vld [vmem:[%s1 + $0x38] sm:$0xf]
  %v36 = vld [vmem:[%s1 + $0x3c] sm:$0xf]
  %v37 = vld [vmem:[%s1 + $0x40] sm:$0xf]
  %v38 = vld [vmem:[%s1 + $0x44] sm:$0xf]
  %v39 = vld [vmem:[%s1 + $0x48] sm:$0xf]
  %v40 = vld [vmem:[%s1 + $0x4c] sm:$0xf]
  %v41 = vld [vmem:[%s1 + $0x50] sm:$0xf]
  %v42 = vld [vmem:[%s1 + $0x54] sm:$0xf]
  %v43 = vld [vmem:[%s1 + $0x58] sm:$0xf]
  %v44 = vld [vmem:[%s1 + $0x5c] sm:$0xf]
  %v45 = vld [vmem:[%s1 + $0x60] sm:$0xf]
  %v46 = vld [vmem:[%s1 + $0x64] sm:$0xf]
  %v47 = vld [vmem:[%s1 + $0x68] sm:$0xf]
  %v48 = vld [vmem:[%s1 + $0x6c] sm:$0xf]
  %v49 = vld [vmem:[%s1 + $0x70] sm:$0xf]
  %v50 = vld [vmem:[%s1 + $0x74] sm:$0xf]
  %v51 = vld [vmem:[%s1 + $0x78] sm:$0xf]
  %v52 = vld [vmem:[%s1 + $0x7c] sm:$0xf]
  %v53 = vld [vmem:[%s1 + $0x80] sm:$0xf]
  %v54 = vld [vmem:[%s1 + $0x84] sm:$0xf]
  %v55 = vld [vmem:[%s1 + $0x88] sm:$0xf]
  %v56 = vld [vmem:[%s1 + $0x8c] sm:$0xf]
  %v57 = vld [vmem:[%s1 + $0x90] sm:$0xf]
  %v58 = vld [vmem:[%s1 + $0x94] sm:$0xf]
  %v59 = vld [vmem:[%s1 + $0x98] sm:$0xf]
  %v60 = vld [vmem:[%s1 + $0x9c] sm:$0xf]
  %v61 = vld [vmem:[%s1 + $0xa0] sm:$0xf]
  %v62 = vld [vmem:[%s1 + $0xa4] sm:$0xf]
  %v63 = vld [vmem:[%s1 + $0xa8] sm:$0xf]
  %v64 = vld [vmem:[%s1 + $0xac] sm:$0xf]
  %v65 = vld [vmem:[%s1 + $0xb0] sm:$0xf]
  %v66 = vld [vmem:[%s1 + $0xb4] sm:$0xf]
  %v67 = vld [vmem:[%s1 + $0xb8] sm:$0xf]
  %v68 = vld [vmem:[%s1 + $0xbc] sm:$0xf]
  %v69 = vld [vmem:[%s1 + $0xc0] sm:$0xf]
  %v70 = vld [vmem:[%s1 + $0xc4] sm:$0xf]
  %v71 = vld [vmem:[%s1 + $0xc8] sm:$0xf]
  %v72 = vld [vmem:[%s1 + $0xcc] sm:$0xf]
  %v73 = vld [vmem:[%s1 + $0xd0] sm:$0xf]
  %v74 = vld [vmem:[%s1 + $0xd4] sm:$0xf]
  %v75 = vld [vmem:[%s1 + $0xd8] sm:$0xf]
  %v76 = vld [vmem:[%s1 + $0xdc] sm:$0xf]
  %v77 = vld [vmem:[%s1 + $0xe0] sm:$0xf]
  %v78 = vld [vmem:[%s1 + $0xe4] sm:$0xf]
  %v79 = vld [vmem:[%s1 + $0xe8] sm:$0xf]
  %v80 = vld [vmem:[%s1 + $0xec] sm:$0xf]
  %v81 = vld [vmem:[%s1 + $0xf0] sm:$0xf]
  %v82 = vld [vmem:[%s1 + $0xf4] sm:$0xf]
  %v83 = vld [vmem:[%s1 + $0xf8] sm:$0xf]
  %v84 = vld [vmem:[%s1 + $0xfc] sm:$0xf]
  %v85 = vld [vmem:[%s1 + $0x100] sm:$0xf]
  %v86 = vld [vmem:[%s1 + $0x104] sm:$0xf]
  %v87 = vld [vmem:[%s1 + $0x108] sm:$0xf]
  %v88 = vld [vmem:[%s1 + $0x10c] sm:$0xf]
  %v89 = vld [vmem:[%s1 + $0x110] sm:$0xf]
  %v90 = vld [vmem:[%s1 + $0x114] sm:$0xf]
  %v91 = vld [vmem:[%s1 + $0x118] sm:$0xf]
  %v92 = vld [vmem:[%s1 + $0x11c] sm:$0xf]
  %v93 = vld [vmem:[%s1 + $0x120] sm:$0xf]
  %v94 = vld [vmem:[%s1 + $0x124] sm:$0xf]
  %v95 = vld [vmem:[%s1 + $0x128] sm:$0xf]
  %v96 = vld [vmem:[%s1 + $0x12c] sm:$0xf]
  %v97 = vld [vmem:[%s1 + $0x130] sm:$0xf]
  %v98 = vld [vmem:[%s1 + $0x134] sm:$0xf]
  %v99 = vld [vmem:[%s1 + $0x138] sm:$0xf]
  %v100 = vld [vmem:[%s1 + $0x13c] sm:$0xf]
  %v107 = vunpack.c.l.b16 %v15
  %v108 = vunpack.c.h.b16 %v15
  %v109 = vunpack.c.l.b16 %v16
  %v110 = vunpack.c.h.b16 %v16
  %v111 = vunpack.c.l.b16 %v17
  %v112 = vunpack.c.l.b16 %v18
  %v113 = vunpack.c.h.b16 %v18
  %v114 = vunpack.c.l.b16 %v19
  %v115 = vunpack.c.h.b16 %v19
  %v116 = vunpack.c.l.b16 %v20
  %v117 = vpack.c.b16 %v112, %v107
  %v118 = vpack.c.b16 %v113, %v108
  %v119 = vpack.c.b16 %v114, %v109
  %v120 = vpack.c.b16 %v115, %v110
  %v121 = vpack.c.b16 %v116, %v111
  %v207 = vunpack.c.l.b16 %v21
  %v208 = vunpack.c.l.b16 %v22
  %v209 = vunpack.c.l.b16 %v23
  %v210 = vunpack.c.l.b16 %v24
  %v211 = vunpack.c.l.b16 %v25
  %v212 = vunpack.c.l.b16 %v26
  %v213 = vunpack.c.l.b16 %v27
  %v214 = vunpack.c.l.b16 %v28
  %v215 = vunpack.c.l.b16 %v29
  %v216 = vunpack.c.l.b16 %v30
  %v217 = vunpack.c.l.b16 %v31
  %v218 = vunpack.c.l.b16 %v32
  %v219 = vunpack.c.l.b16 %v33
  %v220 = vunpack.c.l.b16 %v34
  %v221 = vunpack.c.l.b16 %v35
  %v222 = vunpack.c.l.b16 %v36
  %v223 = vunpack.c.l.b16 %v37
  %v224 = vunpack.c.l.b16 %v38
  %v225 = vunpack.c.l.b16 %v39
  %v226 = vunpack.c.l.b16 %v40
  %v227 = vunpack.c.l.b16 %v41
  %v228 = vunpack.c.l.b16 %v42
  %v229 = vunpack.c.l.b16 %v43
  %v230 = vunpack.c.l.b16 %v44
  %v231 = vunpack.c.l.b16 %v45
  %v232 = vunpack.c.l.b16 %v46
  %v233 = vunpack.c.l.b16 %v47
  %v234 = vunpack.c.l.b16 %v48
  %v235 = vunpack.c.l.b16 %v49
  %v236 = vunpack.c.l.b16 %v50
  %v237 = vunpack.c.l.b16 %v51
  %v238 = vunpack.c.l.b16 %v52
  %v239 = vunpack.c.l.b16 %v53
  %v240 = vunpack.c.l.b16 %v54
  %v241 = vunpack.c.l.b16 %v55
  %v242 = vunpack.c.l.b16 %v56
  %v243 = vunpack.c.l.b16 %v57
  %v244 = vunpack.c.l.b16 %v58
  %v245 = vunpack.c.l.b16 %v59
  %v246 = vunpack.c.l.b16 %v60
  %v247 = vunpack.c.l.b16 %v61
  %v248 = vunpack.c.l.b16 %v62
  %v249 = vunpack.c.l.b16 %v63
  %v250 = vunpack.c.l.b16 %v64
  %v251 = vunpack.c.l.b16 %v65
  %v252 = vunpack.c.l.b16 %v66
  %v253 = vunpack.c.l.b16 %v67
  %v254 = vunpack.c.l.b16 %v68
  %v255 = vunpack.c.l.b16 %v69
  %v256 = vunpack.c.l.b16 %v70
  %v257 = vunpack.c.l.b16 %v71
  %v258 = vunpack.c.l.b16 %v72
  %v259 = vunpack.c.l.b16 %v73
  %v260 = vunpack.c.l.b16 %v74
  %v261 = vunpack.c.l.b16 %v75
  %v262 = vunpack.c.l.b16 %v76
  %v263 = vunpack.c.l.b16 %v77
  %v264 = vunpack.c.l.b16 %v78
  %v265 = vunpack.c.l.b16 %v79
  %v266 = vunpack.c.l.b16 %v80
  %v267 = vunpack.c.l.b16 %v81
  %v268 = vunpack.c.l.b16 %v82
  %v269 = vunpack.c.l.b16 %v83
  %v270 = vunpack.c.l.b16 %v84
  %v271 = vunpack.c.l.b16 %v85
  %v272 = vunpack.c.l.b16 %v86
  %v273 = vunpack.c.l.b16 %v87
  %v274 = vunpack.c.l.b16 %v88
  %v275 = vunpack.c.l.b16 %v89
  %v276 = vunpack.c.l.b16 %v90
  %v277 = vunpack.c.l.b16 %v91
  %v278 = vunpack.c.l.b16 %v92
  %v279 = vunpack.c.l.b16 %v93
  %v280 = vunpack.c.l.b16 %v94
  %v281 = vunpack.c.l.b16 %v95
  %v282 = vunpack.c.l.b16 %v96
  %v283 = vunpack.c.l.b16 %v97
  %v284 = vunpack.c.l.b16 %v98
  %v285 = vunpack.c.l.b16 %v99
  %v286 = vunpack.c.l.b16 %v100
  %v287 = vpack.c.b16 %v208, %v207
  %v288 = vpack.c.b16 %v210, %v209
  %v289 = vpack.c.b16 %v212, %v211
  %v290 = vpack.c.b16 %v214, %v213
  %v291 = vpack.c.b16 %v216, %v215
  %v292 = vpack.c.b16 %v218, %v217
  %v293 = vpack.c.b16 %v220, %v219
  %v294 = vpack.c.b16 %v222, %v221
  %v295 = vpack.c.b16 %v224, %v223
  %v296 = vpack.c.b16 %v226, %v225
  %v297 = vpack.c.b16 %v228, %v227
  %v298 = vpack.c.b16 %v230, %v229
  %v299 = vpack.c.b16 %v232, %v231
  %v300 = vpack.c.b16 %v234, %v233
  %v301 = vpack.c.b16 %v236, %v235
  %v302 = vpack.c.b16 %v238, %v237
  %v303 = vpack.c.b16 %v240, %v239
  %v304 = vpack.c.b16 %v242, %v241
  %v305 = vpack.c.b16 %v244, %v243
  %v306 = vpack.c.b16 %v246, %v245
  %v307 = vpack.c.b16 %v248, %v247
  %v308 = vpack.c.b16 %v250, %v249
  %v309 = vpack.c.b16 %v252, %v251
  %v310 = vpack.c.b16 %v254, %v253
  %v311 = vpack.c.b16 %v256, %v255
  %v312 = vpack.c.b16 %v258, %v257
  %v313 = vpack.c.b16 %v260, %v259
  %v314 = vpack.c.b16 %v262, %v261
  %v315 = vpack.c.b16 %v264, %v263
  %v316 = vpack.c.b16 %v266, %v265
  %v317 = vpack.c.b16 %v268, %v267
  %v318 = vpack.c.b16 %v270, %v269
  %v319 = vpack.c.b16 %v272, %v271
  %v320 = vpack.c.b16 %v274, %v273
  %v321 = vpack.c.b16 %v276, %v275
  %v322 = vpack.c.b16 %v278, %v277
  %v323 = vpack.c.b16 %v280, %v279
  %v324 = vpack.c.b16 %v282, %v281
  %v325 = vpack.c.b16 %v284, %v283
  %v326 = vpack.c.b16 %v286, %v285
  %367 = vmatprep.subr.bf16.mxu0 0
  %368 = vmatpush1.bf16.msra.mxu0 %v287
  %369 = vmatprep.subr.bf16.mxu0 0
  %370 = vmatpush1.bf16.msra.mxu0 %v288
  %371 = vmatprep.subr.bf16.mxu0 0
  %372 = vmatpush1.bf16.msra.mxu0 %v289
  %373 = vmatprep.subr.bf16.mxu0 0
  %374 = vmatpush1.bf16.msra.mxu0 %v290
  %375 = vmatprep.subr.bf16.mxu0 0
  %376 = vmatpush1.bf16.msra.mxu0 %v291
  %377 = vmatprep.subr.bf16.mxu0 0
  %378 = vmatpush1.bf16.msra.mxu0 %v292
  %379 = vmatprep.subr.bf16.mxu0 0
  %380 = vmatpush1.bf16.msra.mxu0 %v293
  %381 = vmatprep.subr.bf16.mxu0 0
  %382 = vmatpush1.bf16.msra.mxu0 %v294
  %383 = vmatprep.subr.bf16.mxu0 0
  %384 = vmatpush1.bf16.msra.mxu0 %v295
  %385 = vmatprep.subr.bf16.mxu0 0
  %386 = vmatpush1.bf16.msra.mxu0 %v296
  %387 = vmatprep.subr.bf16.mxu0 0
  %388 = vmatpush1.bf16.msra.mxu0 %v297
  %389 = vmatprep.subr.bf16.mxu0 0
  %390 = vmatpush1.bf16.msra.mxu0 %v298
  %391 = vmatprep.subr.bf16.mxu0 0
  %392 = vmatpush1.bf16.msra.mxu0 %v299
  %393 = vmatprep.subr.bf16.mxu0 0
  %394 = vmatpush1.bf16.msra.mxu0 %v300
  %395 = vmatprep.subr.bf16.mxu0 0
  %396 = vmatpush1.bf16.msra.mxu0 %v301
  %397 = vmatprep.subr.bf16.mxu0 0
  %398 = vmatpush1.bf16.msra.mxu0 %v302
  %399 = vmatprep.mubr.bf16.mxu0 %v118
  %400 = vmatmul.mubr.bf16.gmra.mrb[0].mxu0 %v117
  %v401 = vpop.f32.mrb[0].mxu0
  %v402 = vadd.f32 0.0, %v401
  %v403 = vpop.f32.mrb[0].mxu0
  %v404 = vpop.f32.mrb[0].mxu0
  %v405 = vadd.f32 0.0, %v404
  %v406 = vpop.f32.mrb[0].mxu0
  %407 = vdwg.mxu0
  %408 = vmatprep.subr.bf16.mxu0 0
  %409 = vmatpush1.bf16.msra.mxu0 %v303
  %410 = vmatprep.subr.bf16.mxu0 0
  %411 = vmatpush1.bf16.msra.mxu0 %v304
  %412 = vmatprep.subr.bf16.mxu0 0
  %413 = vmatpush1.bf16.msra.mxu0 %v305
  %414 = vmatprep.subr.bf16.mxu0 0
  %415 = vmatpush1.bf16.msra.mxu0 %v306
  %416 = vmatprep.subr.bf16.mxu0 0
  %417 = vmatpush1.bf16.msra.mxu0 %v307
  %418 = vmatprep.subr.bf16.mxu0 0
  %419 = vmatpush1.bf16.msra.mxu0 %v308
  %420 = vmatprep.subr.bf16.mxu0 0
  %421 = vmatpush1.bf16.msra.mxu0 %v309
  %422 = vmatprep.subr.bf16.mxu0 0
  %423 = vmatpush1.bf16.msra.mxu0 %v310
  %424 = vmatprep.subr.bf16.mxu0 0
  %425 = vmatpush1.bf16.msra.mxu0 %v311
  %426 = vmatprep.subr.bf16.mxu0 0
  %427 = vmatpush1.bf16.msra.mxu0 %v312
  %428 = vmatprep.subr.bf16.mxu0 0
  %429 = vmatpush1.bf16.msra.mxu0 %v313
  %430 = vmatprep.subr.bf16.mxu0 0
  %431 = vmatpush1.bf16.msra.mxu0 %v314
  %432 = vmatprep.subr.bf16.mxu0 0
  %433 = vmatpush1.bf16.msra.mxu0 %v315
  %434 = vmatprep.subr.bf16.mxu0 0
  %435 = vmatpush1.bf16.msra.mxu0 %v316
  %436 = vmatprep.subr.bf16.mxu0 0
  %437 = vmatpush1.bf16.msra.mxu0 %v317
  %438 = vmatprep.subr.bf16.mxu0 0
  %439 = vmatpush1.bf16.msra.mxu0 %v318
  %440 = vmatprep.mubr.bf16.mxu0 %v120
  %441 = vmatmul.mubr.bf16.gmra.mrb[0].mxu0 %v119
  %v442 = vpop.f32.mrb[0].mxu0
  %v443 = vadd.f32 %v402, %v442
  %v444 = vpop.f32.mrb[0].mxu0
  %v445 = vpop.f32.mrb[0].mxu0
  %v446 = vadd.f32 %v405, %v445
  %v447 = vpop.f32.mrb[0].mxu0
  %448 = vdwg.mxu0
  %449 = vmatprep.subr.bf16.mxu0 0
  %450 = vmatpush1.bf16.msra.mxu0 %v319
  %451 = vmatprep.subr.bf16.mxu0 0
  %452 = vmatpush1.bf16.msra.mxu0 %v320
  %453 = vmatprep.subr.bf16.mxu0 0
  %454 = vmatpush1.bf16.msra.mxu0 %v321
  %455 = vmatprep.subr.bf16.mxu0 0
  %456 = vmatpush1.bf16.msra.mxu0 %v322
  %457 = vmatprep.subr.bf16.mxu0 0
  %458 = vmatpush1.bf16.msra.mxu0 %v323
  %459 = vmatprep.subr.bf16.mxu0 0
  %460 = vmatpush1.bf16.msra.mxu0 %v324
  %461 = vmatprep.subr.bf16.mxu0 0
  %462 = vmatpush1.bf16.msra.mxu0 %v325
  %463 = vmatprep.subr.bf16.mxu0 0
  %464 = vmatpush1.bf16.msra.mxu0 %v326
  %465 = vmatprep.subr.bf16.mxu0 0
  %466 = vmatpush1.bf16.msra.mxu0 0
  %467 = vmatprep.subr.bf16.mxu0 0
  %468 = vmatpush1.bf16.msra.mxu0 0
  %469 = vmatprep.subr.bf16.mxu0 0
  %470 = vmatpush1.bf16.msra.mxu0 0
  %471 = vmatprep.subr.bf16.mxu0 0
  %472 = vmatpush1.bf16.msra.mxu0 0
  %473 = vmatprep.subr.bf16.mxu0 0
  %474 = vmatpush1.bf16.msra.mxu0 0
  %475 = vmatprep.subr.bf16.mxu0 0
  %476 = vmatpush1.bf16.msra.mxu0 0
  %477 = vmatprep.subr.bf16.mxu0 0
  %478 = vmatpush1.bf16.msra.mxu0 0
  %479 = vmatprep.subr.bf16.mxu0 0
  %480 = vmatpush1.bf16.msra.mxu0 0
  %481 = vmatprep.mubr.bf16.mxu0 0
  %482 = vmatmul.mubr.bf16.gmra.mrb[0].mxu0 %v121
  %v483 = vpop.f32.mrb[0].mxu0
  %v484 = vadd.f32 %v443, %v483
  %v485 = vpop.f32.mrb[0].mxu0
  %v486 = vpop.f32.mrb[0].mxu0
  %v487 = vadd.f32 %v446, %v486
  %v488 = vpop.f32.mrb[0].mxu0
  %489 = vdwg.mxu0
  %v490 = vld [vmem:[%s2] sm:$0x1]
  %v491 = vlaneseq
  %v492 = vshrl.u32 %v491, 7
  %v493 = vsub.s32 0, %v492
  %v494 = vrot.slane %v490, %v493
  %v495 = vmul.f32 %v484, %v494
  %v496 = vmul.f32 %v487, %v494
  %v497 = vld [vmem:[%s2 + $0x1] sm:$0x1]
  %v498 = vlaneseq
  %v499 = vshrl.u32 %v498, 7
  %v500 = vsub.s32 0, %v499
  %v501 = vrot.slane %v497, %v500
  %v502 = vadd.f32 %v495, %v501
  %v503 = vadd.f32 %v496, %v501
  %v504 = vmax.f32 %v502, 0.0
  %v505 = vmax.f32 %v503, 0.0
  %506 = vst [vmem:[%s3] sm:$0xff] %v504
  %507 = vst [vmem:[%s3 + $0x8] sm:$0xff] %v505
  // Predicated region
  $region14: #{_lambda_.9} parent=0 // pred_check
    _
  $region15: #{_lambda_.9} parent=0 // pred_check_branch
    %509 = sbr.rel (0) target = $region17
  $region16: #{_lambda_.9} parent=0 // pred_region
    _
  $region17: #{_lambda_.9} parent=0 // pred_fallthru
    _
  // Predicated region
  $region18: #{_lambda_.9} parent=0 // pred_check
    _
  $region19: #{_lambda_.9} parent=0 // pred_check_branch
    %511 = sbr.rel (0) target = $region21
  $region20: #{_lambda_.9} parent=0 // pred_region
    _
  $region21: #{_lambda_.9} parent=0 // pred_fallthru
    _

</llo_original>
